<compile_context>
chip_gen: v7x
topology: tpu7x:2x2x1
jax: 0.10.0
libtpu: 0.0.40
codegen_flags: <defaults>
</compile_context>

<pallas_src>
import jax
import jax.numpy as jnp
from jax.experimental import pallas as pl
from jax.experimental.pallas import tpu as pltpu


def _decoder_gru_kernel(x_ref, h0_ref, w_ih_ref, w_hh_ref, b_ih_ref, b_hh_ref,
                        w_out_ref, b_out_ref,
                        out_ref, hidden_ref):
    # x_ref     : (T*Bp, Hp)   time-major, zero-padded
    # h0_ref    : (Bp, Hp)
    # w_ih_ref  : (Hp, 3*Hp)   gate g lives in lane block [g*Hp, (g+1)*Hp)
    # w_hh_ref  : (Hp, 3*Hp)
    # b_ih_ref  : (1, 3*Hp)
    # b_hh_ref  : (1, 3*Hp)
    # w_out_ref : (Hp, Op)
    # b_out_ref : (1, Op)
    # out_ref   : (Bp, Op)
    # hidden_ref: (Bp, Hp)
    Bp, Hp = h0_ref.shape
    T = x_ref.shape[0] // Bp

    # Hoisted input-side gate pre-activations for ALL timesteps in one MXU matmul:
    #   (T*Bp, Hp) @ (Hp, 3*Hp) + b_ih
    gi_all = jnp.dot(x_ref[...], w_ih_ref[...],
                     preferred_element_type=jnp.float32) + b_ih_ref[...]

    w_hh = w_hh_ref[...]
    b_hh = jnp.broadcast_to(b_hh_ref[...], (Bp, 3 * Hp))   # hoisted broadcast

    def gru_step(gi, h):
        # Only this small matmul sits on the serial critical path.
        gh = jnp.dot(h, w_hh, preferred_element_type=jnp.float32) + b_hh
        # Lane-aligned gate blocks (each is a full 128-lane tile).
        r = jax.nn.sigmoid(gi[:, 0 * Hp:1 * Hp] + gh[:, 0 * Hp:1 * Hp])
        z = jax.nn.sigmoid(gi[:, 1 * Hp:2 * Hp] + gh[:, 1 * Hp:2 * Hp])
        n = jnp.tanh(gi[:, 2 * Hp:3 * Hp] + r * gh[:, 2 * Hp:3 * Hp])
        return (1.0 - z) * n + z * h

    h = h0_ref[...]
    for t in range(T):                       # fully unrolled, static slices
        h = gru_step(gi_all[t * Bp:(t + 1) * Bp, :], h)
        if t == 0:
            # output head depends only on the hidden state after the first step
            logits = jnp.dot(h, w_out_ref[...],
                             preferred_element_type=jnp.float32) + b_out_ref[...]
            out_ref[...] = jnp.maximum(logits, 0.0)   # lane-dense (Bp, Op) store

    hidden_ref[...] = h                      # lane-dense (Bp, Hp) store


def decoder_rnn_forward(x, h0, params):
    """x: (B, T, H) float32, h0: (1, B, H) float32 -> (out (B, O), hidden (1, B, H))."""
    B, T, H = x.shape
    O = params["w_out"].shape[0]
    f32 = jnp.float32

    Hp = ((H + 127) // 128) * 128            # lane-pad hidden dim   (32  -> 128)
    Op = ((O + 127) // 128) * 128            # lane-pad output dim   (16  -> 128)
    Bp = ((B + 7) // 8) * 8                  # sublane-pad batch dim (2   -> 8)

    # --- one-time host/XLA-side packing (tiny) ---------------------------------
    x_tm = jnp.transpose(x, (1, 0, 2)).astype(f32)                      # (T, B, H)
    x_p = (jnp.zeros((T, Bp, Hp), f32).at[:, :B, :H].set(x_tm)
           .reshape(T * Bp, Hp))                                        # (T*Bp, Hp)
    h0_p = jnp.zeros((Bp, Hp), f32).at[:B, :H].set(h0[0].astype(f32))   # (Bp, Hp)

    def pack_gate_w(w):  # (3H, H) -> (Hp, 3*Hp), gate g in lane block [g*Hp, g*Hp+H)
        wt = w.T.astype(f32)                                            # (H, 3H)
        out = jnp.zeros((Hp, 3 * Hp), f32)
        for g in range(3):
            out = out.at[:H, g * Hp:g * Hp + H].set(wt[:, g * H:(g + 1) * H])
        return out

    def pack_gate_b(b):  # (3H,) -> (1, 3*Hp)
        out = jnp.zeros((1, 3 * Hp), f32)
        for g in range(3):
            out = out.at[0, g * Hp:g * Hp + H].set(b[g * H:(g + 1) * H].astype(f32))
        return out

    w_ih_p = pack_gate_w(params["w_ih"])
    w_hh_p = pack_gate_w(params["w_hh"])
    b_ih_p = pack_gate_b(params["b_ih"])
    b_hh_p = pack_gate_b(params["b_hh"])
    w_out_p = jnp.zeros((Hp, Op), f32).at[:H, :O].set(params["w_out"].T.astype(f32))
    b_out_p = jnp.zeros((1, Op), f32).at[0, :O].set(params["b_out"].astype(f32))

    full = lambda i: (0, 0)
    out_p, hid_p = pl.pallas_call(
        _decoder_gru_kernel,
        out_shape=(
            jax.ShapeDtypeStruct((Bp, Op), f32),
            jax.ShapeDtypeStruct((Bp, Hp), f32),
        ),
        grid_spec=pltpu.PrefetchScalarGridSpec(
            num_scalar_prefetch=0,
            grid=(1,),                                   # single invocation
            in_specs=[
                pl.BlockSpec((T * Bp, Hp), full),        # x (whole sequence)
                pl.BlockSpec((Bp, Hp), full),            # h0
                pl.BlockSpec((Hp, 3 * Hp), full),        # W_ih^T (gate-padded)
                pl.BlockSpec((Hp, 3 * Hp), full),        # W_hh^T (gate-padded)
                pl.BlockSpec((1, 3 * Hp), full),         # b_ih
                pl.BlockSpec((1, 3 * Hp), full),         # b_hh
                pl.BlockSpec((Hp, Op), full),            # W_out^T
                pl.BlockSpec((1, Op), full),             # b_out
            ],
            out_specs=[
                pl.BlockSpec((Bp, Op), full),
                pl.BlockSpec((Bp, Hp), full),
            ],
        ),
        compiler_params=pltpu.CompilerParams(
            dimension_semantics=("arbitrary",)),
    )(x_p, h0_p, w_ih_p, w_hh_p, b_ih_p, b_hh_p, w_out_p, b_out_p)

    return out_p[:B, :O], hid_p[None, :B, :H]


def decoder_rnn_reference(x, h0, params):
    """Pure-JAX reference matching PyTorch GRU semantics."""
    H = x.shape[-1]
    w_ih, w_hh = params["w_ih"], params["w_hh"]
    b_ih, b_hh = params["b_ih"], params["b_hh"]

    def step(h, x_t):
        gi = x_t @ w_ih.T + b_ih
        gh = h @ w_hh.T + b_hh
        r = jax.nn.sigmoid(gi[:, :H] + gh[:, :H])
        z = jax.nn.sigmoid(gi[:, H:2 * H] + gh[:, H:2 * H])
        n = jnp.tanh(gi[:, 2 * H:] + r * gh[:, 2 * H:])
        h_new = (1.0 - z) * n + z * h
        return h_new, h_new

    h_last, hs = jax.lax.scan(step, h0[0], jnp.transpose(x, (1, 0, 2)))
    out = jnp.maximum(hs[0] @ params["w_out"].T + params["b_out"], 0.0)
    return out, h_last[None, :, :]


if __name__ == "__main__":
    B, T, H, O = 2, 8, 32, 16   # batch, seq, hidden_size, output_size

    key = jax.random.PRNGKey(0)
    ks = jax.random.split(key, 8)
    scale = 1.0 / jnp.sqrt(H)
    params = {
        "w_ih": jax.random.uniform(ks[0], (3 * H, H), jnp.float32, -scale, scale),
        "w_hh": jax.random.uniform(ks[1], (3 * H, H), jnp.float32, -scale, scale),
        "b_ih": jax.random.uniform(ks[2], (3 * H,), jnp.float32, -scale, scale),
        "b_hh": jax.random.uniform(ks[3], (3 * H,), jnp.float32, -scale, scale),
        "w_out": jax.random.uniform(ks[4], (O, H), jnp.float32, -scale, scale),
        "b_out": jax.random.uniform(ks[5], (O,), jnp.float32, -scale, scale),
    }

    x = jax.random.normal(ks[6], (B, T, H), jnp.float32)
    h0 = jnp.zeros((1, B, H), jnp.float32)   # initHidden(batch_size)

    out, hidden = decoder_rnn_forward(x, h0, params)
    out = jax.block_until_ready(out)
    hidden = jax.block_until_ready(hidden)

    out_ref, hidden_ref = decoder_rnn_reference(x, h0, params)
    assert jnp.allclose(out, out_ref, atol=1e-5, rtol=1e-5), "output mismatch"
    assert jnp.allclose(hidden, hidden_ref, atol=1e-5, rtol=1e-5), "hidden mismatch"

    print("KERNEL_OK")
</pallas_src>

<mosaic_0001>
module attributes {stable_mosaic.version = 11 : i64} {
  func.func @_decoder_gru_kernel(%arg0: i32, %arg1: memref<64x128xf32, #tpu.memory_space<vmem>>, %arg2: memref<8x128xf32, #tpu.memory_space<vmem>>, %arg3: memref<128x384xf32, #tpu.memory_space<vmem>>, %arg4: memref<128x384xf32, #tpu.memory_space<vmem>>, %arg5: memref<1x384xf32, #tpu.memory_space<vmem>>, %arg6: memref<1x384xf32, #tpu.memory_space<vmem>>, %arg7: memref<128x128xf32, #tpu.memory_space<vmem>>, %arg8: memref<1x128xf32, #tpu.memory_space<vmem>>, %arg9: memref<8x128xf32, #tpu.memory_space<vmem>>, %arg10: memref<8x128xf32, #tpu.memory_space<vmem>>) attributes {dimension_semantics = [#tpu.dimension_semantics<arbitrary>], iteration_bounds = array<i64: 1>, scalar_prefetch = 0 : i64, scratch_operands = 0 : i64, tpu.core_type = #tpu.core_type<tc>, window_params = [{pipeline_mode = #tpu.pipeline_mode<synchronous>, transform_indices = @transform_0, window_bounds = array<i64: 64, 128>}, {pipeline_mode = #tpu.pipeline_mode<synchronous>, transform_indices = @transform_1, window_bounds = array<i64: 8, 128>}, {pipeline_mode = #tpu.pipeline_mode<synchronous>, transform_indices = @transform_2, window_bounds = array<i64: 128, 384>}, {pipeline_mode = #tpu.pipeline_mode<synchronous>, transform_indices = @transform_3, window_bounds = array<i64: 128, 384>}, {pipeline_mode = #tpu.pipeline_mode<synchronous>, transform_indices = @transform_4, window_bounds = array<i64: 1, 384>}, {pipeline_mode = #tpu.pipeline_mode<synchronous>, transform_indices = @transform_5, window_bounds = array<i64: 1, 384>}, {pipeline_mode = #tpu.pipeline_mode<synchronous>, transform_indices = @transform_6, window_bounds = array<i64: 128, 128>}, {pipeline_mode = #tpu.pipeline_mode<synchronous>, transform_indices = @transform_7, window_bounds = array<i64: 1, 128>}, {pipeline_mode = #tpu.pipeline_mode<synchronous>, transform_indices = @transform_8, window_bounds = array<i64: 8, 128>}, {pipeline_mode = #tpu.pipeline_mode<synchronous>, transform_indices = @transform_9, window_bounds = array<i64: 8, 128>}]} {
    %c0 = arith.constant 0 : index
    %c0_0 = arith.constant 0 : index
    %0 = vector.load %arg1[%c0, %c0_0] : memref<64x128xf32, #tpu.memory_space<vmem>>, vector<64x128xf32>
    %c0_1 = arith.constant 0 : index
    %c0_2 = arith.constant 0 : index
    %1 = vector.load %arg3[%c0_1, %c0_2] : memref<128x384xf32, #tpu.memory_space<vmem>>, vector<128x384xf32>
    %cst = arith.constant dense<0.000000e+00> : vector<64x384xf32>
    %2 = tpu.matmul %0, %1, %cst {dimension_numbers = #tpu.dot_dimension_numbers<[1], [0], [0], [1], [0, 0, 1, 1], [], []>} : vector<64x128xf32>, vector<128x384xf32>, vector<64x384xf32> -> vector<64x384xf32>
    %c0_3 = arith.constant 0 : index
    %c0_4 = arith.constant 0 : index
    %3 = vector.load %arg5[%c0_3, %c0_4] : memref<1x384xf32, #tpu.memory_space<vmem>>, vector<1x384xf32>
    %4 = vector.broadcast %3 : vector<1x384xf32> to vector<64x384xf32>
    %5 = arith.addf %2, %4 : vector<64x384xf32>
    %c0_5 = arith.constant 0 : index
    %c0_6 = arith.constant 0 : index
    %6 = vector.load %arg4[%c0_5, %c0_6] : memref<128x384xf32, #tpu.memory_space<vmem>>, vector<128x384xf32>
    %c0_7 = arith.constant 0 : index
    %c0_8 = arith.constant 0 : index
    %7 = vector.load %arg6[%c0_7, %c0_8] : memref<1x384xf32, #tpu.memory_space<vmem>>, vector<1x384xf32>
    %8 = vector.shape_cast %7 : vector<1x384xf32> to vector<1x384xf32>
    %9 = vector.broadcast %8 : vector<1x384xf32> to vector<8x384xf32>
    %c0_9 = arith.constant 0 : index
    %c0_10 = arith.constant 0 : index
    %10 = vector.load %arg2[%c0_9, %c0_10] : memref<8x128xf32, #tpu.memory_space<vmem>>, vector<8x128xf32>
    %11 = vector.extract_strided_slice %5 {offsets = [0, 0], sizes = [8, 384], strides = [1, 1]} : vector<64x384xf32> to vector<8x384xf32>
    %cst_11 = arith.constant dense<0.000000e+00> : vector<8x384xf32>
    %12 = tpu.matmul %10, %6, %cst_11 {dimension_numbers = #tpu.dot_dimension_numbers<[1], [0], [0], [1], [0, 0, 1, 1], [], []>} : vector<8x128xf32>, vector<128x384xf32>, vector<8x384xf32> -> vector<8x384xf32>
    %13 = arith.addf %12, %9 : vector<8x384xf32>
    %14 = vector.extract_strided_slice %11 {offsets = [0, 0], sizes = [8, 128], strides = [1, 1]} : vector<8x384xf32> to vector<8x128xf32>
    %15 = vector.extract_strided_slice %13 {offsets = [0, 0], sizes = [8, 128], strides = [1, 1]} : vector<8x384xf32> to vector<8x128xf32>
    %16 = arith.addf %14, %15 : vector<8x128xf32>
    %17 = arith.negf %16 : vector<8x128xf32>
    %18 = math.exp %17 : vector<8x128xf32>
    %cst_12 = arith.constant 1.000000e+00 : f32
    %19 = vector.broadcast %cst_12 : f32 to vector<8x128xf32>
    %20 = arith.addf %19, %18 : vector<8x128xf32>
    %21 = arith.divf %19, %20 : vector<8x128xf32>
    %22 = vector.extract_strided_slice %11 {offsets = [0, 128], sizes = [8, 128], strides = [1, 1]} : vector<8x384xf32> to vector<8x128xf32>
    %23 = vector.extract_strided_slice %13 {offsets = [0, 128], sizes = [8, 128], strides = [1, 1]} : vector<8x384xf32> to vector<8x128xf32>
    %24 = arith.addf %22, %23 : vector<8x128xf32>
    %25 = arith.negf %24 : vector<8x128xf32>
    %26 = math.exp %25 : vector<8x128xf32>
    %cst_13 = arith.constant 1.000000e+00 : f32
    %27 = vector.broadcast %cst_13 : f32 to vector<8x128xf32>
    %28 = arith.addf %27, %26 : vector<8x128xf32>
    %29 = arith.divf %27, %28 : vector<8x128xf32>
    %30 = vector.extract_strided_slice %11 {offsets = [0, 256], sizes = [8, 128], strides = [1, 1]} : vector<8x384xf32> to vector<8x128xf32>
    %31 = vector.extract_strided_slice %13 {offsets = [0, 256], sizes = [8, 128], strides = [1, 1]} : vector<8x384xf32> to vector<8x128xf32>
    %32 = arith.mulf %21, %31 : vector<8x128xf32>
    %33 = arith.addf %30, %32 : vector<8x128xf32>
    %34 = math.tanh %33 : vector<8x128xf32>
    %cst_14 = arith.constant 1.000000e+00 : f32
    %35 = vector.broadcast %cst_14 : f32 to vector<8x128xf32>
    %36 = arith.subf %35, %29 : vector<8x128xf32>
    %37 = arith.mulf %36, %34 : vector<8x128xf32>
    %38 = arith.mulf %29, %10 : vector<8x128xf32>
    %39 = arith.addf %37, %38 : vector<8x128xf32>
    %c0_15 = arith.constant 0 : index
    %c0_16 = arith.constant 0 : index
    %40 = vector.load %arg7[%c0_15, %c0_16] : memref<128x128xf32, #tpu.memory_space<vmem>>, vector<128x128xf32>
    %cst_17 = arith.constant dense<0.000000e+00> : vector<8x128xf32>
    %41 = tpu.matmul %39, %40, %cst_17 {dimension_numbers = #tpu.dot_dimension_numbers<[1], [0], [0], [1], [0, 0, 1, 1], [], []>} : vector<8x128xf32>, vector<128x128xf32>, vector<8x128xf32> -> vector<8x128xf32>
    %c0_18 = arith.constant 0 : index
    %c0_19 = arith.constant 0 : index
    %42 = vector.load %arg8[%c0_18, %c0_19] : memref<1x128xf32, #tpu.memory_space<vmem>>, vector<1x128xf32>
    %43 = vector.broadcast %42 : vector<1x128xf32> to vector<8x128xf32>
    %44 = arith.addf %41, %43 : vector<8x128xf32>
    %cst_20 = arith.constant 0.000000e+00 : f32
    %45 = vector.broadcast %cst_20 : f32 to vector<8x128xf32>
    %46 = arith.maximumf %44, %45 : vector<8x128xf32>
    %c0_21 = arith.constant 0 : index
    %c0_22 = arith.constant 0 : index
    %47 = vector.load %arg9[%c0_21, %c0_22] : memref<8x128xf32, #tpu.memory_space<vmem>>, vector<8x128xf32>
    tpu.vector_store %arg9[%c0_21, %c0_22], %46 {strides = array<i32>} : memref<8x128xf32, #tpu.memory_space<vmem>>, vector<8x128xf32>,
    %48 = vector.extract_strided_slice %5 {offsets = [8, 0], sizes = [8, 384], strides = [1, 1]} : vector<64x384xf32> to vector<8x384xf32>
    %cst_23 = arith.constant dense<0.000000e+00> : vector<8x384xf32>
    %49 = tpu.matmul %39, %6, %cst_23 {dimension_numbers = #tpu.dot_dimension_numbers<[1], [0], [0], [1], [0, 0, 1, 1], [], []>} : vector<8x128xf32>, vector<128x384xf32>, vector<8x384xf32> -> vector<8x384xf32>
    %50 = arith.addf %49, %9 : vector<8x384xf32>
    %51 = vector.extract_strided_slice %48 {offsets = [0, 0], sizes = [8, 128], strides = [1, 1]} : vector<8x384xf32> to vector<8x128xf32>
    %52 = vector.extract_strided_slice %50 {offsets = [0, 0], sizes = [8, 128], strides = [1, 1]} : vector<8x384xf32> to vector<8x128xf32>
    %53 = arith.addf %51, %52 : vector<8x128xf32>
    %54 = arith.negf %53 : vector<8x128xf32>
    %55 = math.exp %54 : vector<8x128xf32>
    %cst_24 = arith.constant 1.000000e+00 : f32
    %56 = vector.broadcast %cst_24 : f32 to vector<8x128xf32>
    %57 = arith.addf %56, %55 : vector<8x128xf32>
    %58 = arith.divf %56, %57 : vector<8x128xf32>
    %59 = vector.extract_strided_slice %48 {offsets = [0, 128], sizes = [8, 128], strides = [1, 1]} : vector<8x384xf32> to vector<8x128xf32>
    %60 = vector.extract_strided_slice %50 {offsets = [0, 128], sizes = [8, 128], strides = [1, 1]} : vector<8x384xf32> to vector<8x128xf32>
    %61 = arith.addf %59, %60 : vector<8x128xf32>
    %62 = arith.negf %61 : vector<8x128xf32>
    %63 = math.exp %62 : vector<8x128xf32>
    %cst_25 = arith.constant 1.000000e+00 : f32
    %64 = vector.broadcast %cst_25 : f32 to vector<8x128xf32>
    %65 = arith.addf %64, %63 : vector<8x128xf32>
    %66 = arith.divf %64, %65 : vector<8x128xf32>
    %67 = vector.extract_strided_slice %48 {offsets = [0, 256], sizes = [8, 128], strides = [1, 1]} : vector<8x384xf32> to vector<8x128xf32>
    %68 = vector.extract_strided_slice %50 {offsets = [0, 256], sizes = [8, 128], strides = [1, 1]} : vector<8x384xf32> to vector<8x128xf32>
    %69 = arith.mulf %58, %68 : vector<8x128xf32>
    %70 = arith.addf %67, %69 : vector<8x128xf32>
    %71 = math.tanh %70 : vector<8x128xf32>
    %cst_26 = arith.constant 1.000000e+00 : f32
    %72 = vector.broadcast %cst_26 : f32 to vector<8x128xf32>
    %73 = arith.subf %72, %66 : vector<8x128xf32>
    %74 = arith.mulf %73, %71 : vector<8x128xf32>
    %75 = arith.mulf %66, %39 : vector<8x128xf32>
    %76 = arith.addf %74, %75 : vector<8x128xf32>
    %77 = vector.extract_strided_slice %5 {offsets = [16, 0], sizes = [8, 384], strides = [1, 1]} : vector<64x384xf32> to vector<8x384xf32>
    %cst_27 = arith.constant dense<0.000000e+00> : vector<8x384xf32>
    %78 = tpu.matmul %76, %6, %cst_27 {dimension_numbers = #tpu.dot_dimension_numbers<[1], [0], [0], [1], [0, 0, 1, 1], [], []>} : vector<8x128xf32>, vector<128x384xf32>, vector<8x384xf32> -> vector<8x384xf32>
    %79 = arith.addf %78, %9 : vector<8x384xf32>
    %80 = vector.extract_strided_slice %77 {offsets = [0, 0], sizes = [8, 128], strides = [1, 1]} : vector<8x384xf32> to vector<8x128xf32>
    %81 = vector.extract_strided_slice %79 {offsets = [0, 0], sizes = [8, 128], strides = [1, 1]} : vector<8x384xf32> to vector<8x128xf32>
    %82 = arith.addf %80, %81 : vector<8x128xf32>
    %83 = arith.negf %82 : vector<8x128xf32>
    %84 = math.exp %83 : vector<8x128xf32>
    %cst_28 = arith.constant 1.000000e+00 : f32
    %85 = vector.broadcast %cst_28 : f32 to vector<8x128xf32>
    %86 = arith.addf %85, %84 : vector<8x128xf32>
    %87 = arith.divf %85, %86 : vector<8x128xf32>
    %88 = vector.extract_strided_slice %77 {offsets = [0, 128], sizes = [8, 128], strides = [1, 1]} : vector<8x384xf32> to vector<8x128xf32>
    %89 = vector.extract_strided_slice %79 {offsets = [0, 128], sizes = [8, 128], strides = [1, 1]} : vector<8x384xf32> to vector<8x128xf32>
    %90 = arith.addf %88, %89 : vector<8x128xf32>
    %91 = arith.negf %90 : vector<8x128xf32>
    %92 = math.exp %91 : vector<8x128xf32>
    %cst_29 = arith.constant 1.000000e+00 : f32
    %93 = vector.broadcast %cst_29 : f32 to vector<8x128xf32>
    %94 = arith.addf %93, %92 : vector<8x128xf32>
    %95 = arith.divf %93, %94 : vector<8x128xf32>
    %96 = vector.extract_strided_slice %77 {offsets = [0, 256], sizes = [8, 128], strides = [1, 1]} : vector<8x384xf32> to vector<8x128xf32>
    %97 = vector.extract_strided_slice %79 {offsets = [0, 256], sizes = [8, 128], strides = [1, 1]} : vector<8x384xf32> to vector<8x128xf32>
    %98 = arith.mulf %87, %97 : vector<8x128xf32>
    %99 = arith.addf %96, %98 : vector<8x128xf32>
    %100 = math.tanh %99 : vector<8x128xf32>
    %cst_30 = arith.constant 1.000000e+00 : f32
    %101 = vector.broadcast %cst_30 : f32 to vector<8x128xf32>
    %102 = arith.subf %101, %95 : vector<8x128xf32>
    %103 = arith.mulf %102, %100 : vector<8x128xf32>
    %104 = arith.mulf %95, %76 : vector<8x128xf32>
    %105 = arith.addf %103, %104 : vector<8x128xf32>
    %106 = vector.extract_strided_slice %5 {offsets = [24, 0], sizes = [8, 384], strides = [1, 1]} : vector<64x384xf32> to vector<8x384xf32>
    %cst_31 = arith.constant dense<0.000000e+00> : vector<8x384xf32>
    %107 = tpu.matmul %105, %6, %cst_31 {dimension_numbers = #tpu.dot_dimension_numbers<[1], [0], [0], [1], [0, 0, 1, 1], [], []>} : vector<8x128xf32>, vector<128x384xf32>, vector<8x384xf32> -> vector<8x384xf32>
    %108 = arith.addf %107, %9 : vector<8x384xf32>
    %109 = vector.extract_strided_slice %106 {offsets = [0, 0], sizes = [8, 128], strides = [1, 1]} : vector<8x384xf32> to vector<8x128xf32>
    %110 = vector.extract_strided_slice %108 {offsets = [0, 0], sizes = [8, 128], strides = [1, 1]} : vector<8x384xf32> to vector<8x128xf32>
    %111 = arith.addf %109, %110 : vector<8x128xf32>
    %112 = arith.negf %111 : vector<8x128xf32>
    %113 = math.exp %112 : vector<8x128xf32>
    %cst_32 = arith.constant 1.000000e+00 : f32
    %114 = vector.broadcast %cst_32 : f32 to vector<8x128xf32>
    %115 = arith.addf %114, %113 : vector<8x128xf32>
    %116 = arith.divf %114, %115 : vector<8x128xf32>
    %117 = vector.extract_strided_slice %106 {offsets = [0, 128], sizes = [8, 128], strides = [1, 1]} : vector<8x384xf32> to vector<8x128xf32>
    %118 = vector.extract_strided_slice %108 {offsets = [0, 128], sizes = [8, 128], strides = [1, 1]} : vector<8x384xf32> to vector<8x128xf32>
    %119 = arith.addf %117, %118 : vector<8x128xf32>
    %120 = arith.negf %119 : vector<8x128xf32>
    %121 = math.exp %120 : vector<8x128xf32>
    %cst_33 = arith.constant 1.000000e+00 : f32
    %122 = vector.broadcast %cst_33 : f32 to vector<8x128xf32>
    %123 = arith.addf %122, %121 : vector<8x128xf32>
    %124 = arith.divf %122, %123 : vector<8x128xf32>
    %125 = vector.extract_strided_slice %106 {offsets = [0, 256], sizes = [8, 128], strides = [1, 1]} : vector<8x384xf32> to vector<8x128xf32>
    %126 = vector.extract_strided_slice %108 {offsets = [0, 256], sizes = [8, 128], strides = [1, 1]} : vector<8x384xf32> to vector<8x128xf32>
    %127 = arith.mulf %116, %126 : vector<8x128xf32>
    %128 = arith.addf %125, %127 : vector<8x128xf32>
    %129 = math.tanh %128 : vector<8x128xf32>
    %cst_34 = arith.constant 1.000000e+00 : f32
    %130 = vector.broadcast %cst_34 : f32 to vector<8x128xf32>
    %131 = arith.subf %130, %124 : vector<8x128xf32>
    %132 = arith.mulf %131, %129 : vector<8x128xf32>
    %133 = arith.mulf %124, %105 : vector<8x128xf32>
    %134 = arith.addf %132, %133 : vector<8x128xf32>
    %135 = vector.extract_strided_slice %5 {offsets = [32, 0], sizes = [8, 384], strides = [1, 1]} : vector<64x384xf32> to vector<8x384xf32>
    %cst_35 = arith.constant dense<0.000000e+00> : vector<8x384xf32>
    %136 = tpu.matmul %134, %6, %cst_35 {dimension_numbers = #tpu.dot_dimension_numbers<[1], [0], [0], [1], [0, 0, 1, 1], [], []>} : vector<8x128xf32>, vector<128x384xf32>, vector<8x384xf32> -> vector<8x384xf32>
    %137 = arith.addf %136, %9 : vector<8x384xf32>
    %138 = vector.extract_strided_slice %135 {offsets = [0, 0], sizes = [8, 128], strides = [1, 1]} : vector<8x384xf32> to vector<8x128xf32>
    %139 = vector.extract_strided_slice %137 {offsets = [0, 0], sizes = [8, 128], strides = [1, 1]} : vector<8x384xf32> to vector<8x128xf32>
    %140 = arith.addf %138, %139 : vector<8x128xf32>
    %141 = arith.negf %140 : vector<8x128xf32>
    %142 = math.exp %141 : vector<8x128xf32>
    %cst_36 = arith.constant 1.000000e+00 : f32
    %143 = vector.broadcast %cst_36 : f32 to vector<8x128xf32>
    %144 = arith.addf %143, %142 : vector<8x128xf32>
    %145 = arith.divf %143, %144 : vector<8x128xf32>
    %146 = vector.extract_strided_slice %135 {offsets = [0, 128], sizes = [8, 128], strides = [1, 1]} : vector<8x384xf32> to vector<8x128xf32>
    %147 = vector.extract_strided_slice %137 {offsets = [0, 128], sizes = [8, 128], strides = [1, 1]} : vector<8x384xf32> to vector<8x128xf32>
    %148 = arith.addf %146, %147 : vector<8x128xf32>
    %149 = arith.negf %148 : vector<8x128xf32>
    %150 = math.exp %149 : vector<8x128xf32>
    %cst_37 = arith.constant 1.000000e+00 : f32
    %151 = vector.broadcast %cst_37 : f32 to vector<8x128xf32>
    %152 = arith.addf %151, %150 : vector<8x128xf32>
    %153 = arith.divf %151, %152 : vector<8x128xf32>
    %154 = vector.extract_strided_slice %135 {offsets = [0, 256], sizes = [8, 128], strides = [1, 1]} : vector<8x384xf32> to vector<8x128xf32>
    %155 = vector.extract_strided_slice %137 {offsets = [0, 256], sizes = [8, 128], strides = [1, 1]} : vector<8x384xf32> to vector<8x128xf32>
    %156 = arith.mulf %145, %155 : vector<8x128xf32>
    %157 = arith.addf %154, %156 : vector<8x128xf32>
    %158 = math.tanh %157 : vector<8x128xf32>
    %cst_38 = arith.constant 1.000000e+00 : f32
    %159 = vector.broadcast %cst_38 : f32 to vector<8x128xf32>
    %160 = arith.subf %159, %153 : vector<8x128xf32>
    %161 = arith.mulf %160, %158 : vector<8x128xf32>
    %162 = arith.mulf %153, %134 : vector<8x128xf32>
    %163 = arith.addf %161, %162 : vector<8x128xf32>
    %164 = vector.extract_strided_slice %5 {offsets = [40, 0], sizes = [8, 384], strides = [1, 1]} : vector<64x384xf32> to vector<8x384xf32>
    %cst_39 = arith.constant dense<0.000000e+00> : vector<8x384xf32>
    %165 = tpu.matmul %163, %6, %cst_39 {dimension_numbers = #tpu.dot_dimension_numbers<[1], [0], [0], [1], [0, 0, 1, 1], [], []>} : vector<8x128xf32>, vector<128x384xf32>, vector<8x384xf32> -> vector<8x384xf32>
    %166 = arith.addf %165, %9 : vector<8x384xf32>
    %167 = vector.extract_strided_slice %164 {offsets = [0, 0], sizes = [8, 128], strides = [1, 1]} : vector<8x384xf32> to vector<8x128xf32>
    %168 = vector.extract_strided_slice %166 {offsets = [0, 0], sizes = [8, 128], strides = [1, 1]} : vector<8x384xf32> to vector<8x128xf32>
    %169 = arith.addf %167, %168 : vector<8x128xf32>
    %170 = arith.negf %169 : vector<8x128xf32>
    %171 = math.exp %170 : vector<8x128xf32>
    %cst_40 = arith.constant 1.000000e+00 : f32
    %172 = vector.broadcast %cst_40 : f32 to vector<8x128xf32>
    %173 = arith.addf %172, %171 : vector<8x128xf32>
    %174 = arith.divf %172, %173 : vector<8x128xf32>
    %175 = vector.extract_strided_slice %164 {offsets = [0, 128], sizes = [8, 128], strides = [1, 1]} : vector<8x384xf32> to vector<8x128xf32>
    %176 = vector.extract_strided_slice %166 {offsets = [0, 128], sizes = [8, 128], strides = [1, 1]} : vector<8x384xf32> to vector<8x128xf32>
    %177 = arith.addf %175, %176 : vector<8x128xf32>
    %178 = arith.negf %177 : vector<8x128xf32>
    %179 = math.exp %178 : vector<8x128xf32>
    %cst_41 = arith.constant 1.000000e+00 : f32
    %180 = vector.broadcast %cst_41 : f32 to vector<8x128xf32>
    %181 = arith.addf %180, %179 : vector<8x128xf32>
    %182 = arith.divf %180, %181 : vector<8x128xf32>
    %183 = vector.extract_strided_slice %164 {offsets = [0, 256], sizes = [8, 128], strides = [1, 1]} : vector<8x384xf32> to vector<8x128xf32>
    %184 = vector.extract_strided_slice %166 {offsets = [0, 256], sizes = [8, 128], strides = [1, 1]} : vector<8x384xf32> to vector<8x128xf32>
    %185 = arith.mulf %174, %184 : vector<8x128xf32>
    %186 = arith.addf %183, %185 : vector<8x128xf32>
    %187 = math.tanh %186 : vector<8x128xf32>
    %cst_42 = arith.constant 1.000000e+00 : f32
    %188 = vector.broadcast %cst_42 : f32 to vector<8x128xf32>
    %189 = arith.subf %188, %182 : vector<8x128xf32>
    %190 = arith.mulf %189, %187 : vector<8x128xf32>
    %191 = arith.mulf %182, %163 : vector<8x128xf32>
    %192 = arith.addf %190, %191 : vector<8x128xf32>
    %193 = vector.extract_strided_slice %5 {offsets = [48, 0], sizes = [8, 384], strides = [1, 1]} : vector<64x384xf32> to vector<8x384xf32>
    %cst_43 = arith.constant dense<0.000000e+00> : vector<8x384xf32>
    %194 = tpu.matmul %192, %6, %cst_43 {dimension_numbers = #tpu.dot_dimension_numbers<[1], [0], [0], [1], [0, 0, 1, 1], [], []>} : vector<8x128xf32>, vector<128x384xf32>, vector<8x384xf32> -> vector<8x384xf32>
    %195 = arith.addf %194, %9 : vector<8x384xf32>
    %196 = vector.extract_strided_slice %193 {offsets = [0, 0], sizes = [8, 128], strides = [1, 1]} : vector<8x384xf32> to vector<8x128xf32>
    %197 = vector.extract_strided_slice %195 {offsets = [0, 0], sizes = [8, 128], strides = [1, 1]} : vector<8x384xf32> to vector<8x128xf32>
    %198 = arith.addf %196, %197 : vector<8x128xf32>
    %199 = arith.negf %198 : vector<8x128xf32>
    %200 = math.exp %199 : vector<8x128xf32>
    %cst_44 = arith.constant 1.000000e+00 : f32
    %201 = vector.broadcast %cst_44 : f32 to vector<8x128xf32>
    %202 = arith.addf %201, %200 : vector<8x128xf32>
    %203 = arith.divf %201, %202 : vector<8x128xf32>
    %204 = vector.extract_strided_slice %193 {offsets = [0, 128], sizes = [8, 128], strides = [1, 1]} : vector<8x384xf32> to vector<8x128xf32>
    %205 = vector.extract_strided_slice %195 {offsets = [0, 128], sizes = [8, 128], strides = [1, 1]} : vector<8x384xf32> to vector<8x128xf32>
    %206 = arith.addf %204, %205 : vector<8x128xf32>
    %207 = arith.negf %206 : vector<8x128xf32>
    %208 = math.exp %207 : vector<8x128xf32>
    %cst_45 = arith.constant 1.000000e+00 : f32
    %209 = vector.broadcast %cst_45 : f32 to vector<8x128xf32>
    %210 = arith.addf %209, %208 : vector<8x128xf32>
    %211 = arith.divf %209, %210 : vector<8x128xf32>
    %212 = vector.extract_strided_slice %193 {offsets = [0, 256], sizes = [8, 128], strides = [1, 1]} : vector<8x384xf32> to vector<8x128xf32>
    %213 = vector.extract_strided_slice %195 {offsets = [0, 256], sizes = [8, 128], strides = [1, 1]} : vector<8x384xf32> to vector<8x128xf32>
    %214 = arith.mulf %203, %213 : vector<8x128xf32>
    %215 = arith.addf %212, %214 : vector<8x128xf32>
    %216 = math.tanh %215 : vector<8x128xf32>
    %cst_46 = arith.constant 1.000000e+00 : f32
    %217 = vector.broadcast %cst_46 : f32 to vector<8x128xf32>
    %218 = arith.subf %217, %211 : vector<8x128xf32>
    %219 = arith.mulf %218, %216 : vector<8x128xf32>
    %220 = arith.mulf %211, %192 : vector<8x128xf32>
    %221 = arith.addf %219, %220 : vector<8x128xf32>
    %222 = vector.extract_strided_slice %5 {offsets = [56, 0], sizes = [8, 384], strides = [1, 1]} : vector<64x384xf32> to vector<8x384xf32>
    %cst_47 = arith.constant dense<0.000000e+00> : vector<8x384xf32>
    %223 = tpu.matmul %221, %6, %cst_47 {dimension_numbers = #tpu.dot_dimension_numbers<[1], [0], [0], [1], [0, 0, 1, 1], [], []>} : vector<8x128xf32>, vector<128x384xf32>, vector<8x384xf32> -> vector<8x384xf32>
    %224 = arith.addf %223, %9 : vector<8x384xf32>
    %225 = vector.extract_strided_slice %222 {offsets = [0, 0], sizes = [8, 128], strides = [1, 1]} : vector<8x384xf32> to vector<8x128xf32>
    %226 = vector.extract_strided_slice %224 {offsets = [0, 0], sizes = [8, 128], strides = [1, 1]} : vector<8x384xf32> to vector<8x128xf32>
    %227 = arith.addf %225, %226 : vector<8x128xf32>
    %228 = arith.negf %227 : vector<8x128xf32>
    %229 = math.exp %228 : vector<8x128xf32>
    %cst_48 = arith.constant 1.000000e+00 : f32
    %230 = vector.broadcast %cst_48 : f32 to vector<8x128xf32>
    %231 = arith.addf %230, %229 : vector<8x128xf32>
    %232 = arith.divf %230, %231 : vector<8x128xf32>
    %233 = vector.extract_strided_slice %222 {offsets = [0, 128], sizes = [8, 128], strides = [1, 1]} : vector<8x384xf32> to vector<8x128xf32>
    %234 = vector.extract_strided_slice %224 {offsets = [0, 128], sizes = [8, 128], strides = [1, 1]} : vector<8x384xf32> to vector<8x128xf32>
    %235 = arith.addf %233, %234 : vector<8x128xf32>
    %236 = arith.negf %235 : vector<8x128xf32>
    %237 = math.exp %236 : vector<8x128xf32>
    %cst_49 = arith.constant 1.000000e+00 : f32
    %238 = vector.broadcast %cst_49 : f32 to vector<8x128xf32>
    %239 = arith.addf %238, %237 : vector<8x128xf32>
    %240 = arith.divf %238, %239 : vector<8x128xf32>
    %241 = vector.extract_strided_slice %222 {offsets = [0, 256], sizes = [8, 128], strides = [1, 1]} : vector<8x384xf32> to vector<8x128xf32>
    %242 = vector.extract_strided_slice %224 {offsets = [0, 256], sizes = [8, 128], strides = [1, 1]} : vector<8x384xf32> to vector<8x128xf32>
    %243 = arith.mulf %232, %242 : vector<8x128xf32>
    %244 = arith.addf %241, %243 : vector<8x128xf32>
    %245 = math.tanh %244 : vector<8x128xf32>
    %cst_50 = arith.constant 1.000000e+00 : f32
    %246 = vector.broadcast %cst_50 : f32 to vector<8x128xf32>
    %247 = arith.subf %246, %240 : vector<8x128xf32>
    %248 = arith.mulf %247, %245 : vector<8x128xf32>
    %249 = arith.mulf %240, %221 : vector<8x128xf32>
    %250 = arith.addf %248, %249 : vector<8x128xf32>
    %c0_51 = arith.constant 0 : index
    %c0_52 = arith.constant 0 : index
    %251 = vector.load %arg10[%c0_51, %c0_52] : memref<8x128xf32, #tpu.memory_space<vmem>>, vector<8x128xf32>
    tpu.vector_store %arg10[%c0_51, %c0_52], %250 {strides = array<i32>} : memref<8x128xf32, #tpu.memory_space<vmem>>, vector<8x128xf32>,
    return
  }
  func.func @transform_0(%arg0: i32) -> (i32, i32) {
    %c0_i32 = arith.constant 0 : i32
    %c0_i32_0 = arith.constant 0 : i32
    %c0_i32_1 = arith.constant 0 : i32
    return %c0_i32, %c0_i32_0 : i32, i32
  }
  func.func @transform_1(%arg0: i32) -> (i32, i32) {
    %c0_i32 = arith.constant 0 : i32
    %c0_i32_0 = arith.constant 0 : i32
    %c0_i32_1 = arith.constant 0 : i32
    return %c0_i32, %c0_i32_0 : i32, i32
  }
  func.func @transform_2(%arg0: i32) -> (i32, i32) {
    %c0_i32 = arith.constant 0 : i32
    %c0_i32_0 = arith.constant 0 : i32
    %c0_i32_1 = arith.constant 0 : i32
    return %c0_i32, %c0_i32_0 : i32, i32
  }
  func.func @transform_3(%arg0: i32) -> (i32, i32) {
    %c0_i32 = arith.constant 0 : i32
    %c0_i32_0 = arith.constant 0 : i32
    %c0_i32_1 = arith.constant 0 : i32
    return %c0_i32, %c0_i32_0 : i32, i32
  }
  func.func @transform_4(%arg0: i32) -> (i32, i32) {
    %c0_i32 = arith.constant 0 : i32
    %c0_i32_0 = arith.constant 0 : i32
    %c0_i32_1 = arith.constant 0 : i32
    return %c0_i32, %c0_i32_0 : i32, i32
  }
  func.func @transform_5(%arg0: i32) -> (i32, i32) {
    %c0_i32 = arith.constant 0 : i32
    %c0_i32_0 = arith.constant 0 : i32
    %c0_i32_1 = arith.constant 0 : i32
    return %c0_i32, %c0_i32_0 : i32, i32
  }
  func.func @transform_6(%arg0: i32) -> (i32, i32) {
    %c0_i32 = arith.constant 0 : i32
    %c0_i32_0 = arith.constant 0 : i32
    %c0_i32_1 = arith.constant 0 : i32
    return %c0_i32, %c0_i32_0 : i32, i32
  }
  func.func @transform_7(%arg0: i32) -> (i32, i32) {
    %c0_i32 = arith.constant 0 : i32
    %c0_i32_0 = arith.constant 0 : i32
    %c0_i32_1 = arith.constant 0 : i32
    return %c0_i32, %c0_i32_0 : i32, i32
  }
  func.func @transform_8(%arg0: i32) -> (i32, i32) {
    %c0_i32 = arith.constant 0 : i32
    %c0_i32_0 = arith.constant 0 : i32
    %c0_i32_1 = arith.constant 0 : i32
    return %c0_i32, %c0_i32_0 : i32, i32
  }
  func.func @transform_9(%arg0: i32) -> (i32, i32) {
    %c0_i32 = arith.constant 0 : i32
    %c0_i32_0 = arith.constant 0 : i32
    %c0_i32_1 = arith.constant 0 : i32
    return %c0_i32, %c0_i32_0 : i32, i32
  }
}

</mosaic_0001>

<llo_original>
// kernel: tpu_custom_call.1
$region0: #{tpu_custom_call.1}
  #allocation0 [shape = 'u32[]', space=smem, size = 0x4, offset = 0x4, fixed_abs, tag = 'smem constant byte address 0x4 - core index']
  #allocation1 [shape = 'u32[144,128]{1,0:T(1,128)}', space=vmem, size = 0x12000, scoped, tag = 'internal scratch']
  %s0 = inlined_call_operand.hbm [shape: f32[64,128], index: 0, kind: input, shape index: {}]
  %s1 = inlined_call_operand.hbm [shape: f32[8,128], index: 1, kind: input, shape index: {}]
  %s2 = inlined_call_operand.hbm [shape: f32[128,384], index: 2, kind: input, shape index: {}]
  %s3 = inlined_call_operand.hbm [shape: f32[128,384], index: 3, kind: input, shape index: {}]
  %s4 = inlined_call_operand.vmem [shape: f32[1,384], index: 4, kind: input, shape index: {}]
  %s5 = inlined_call_operand.vmem [shape: f32[1,384], index: 5, kind: input, shape index: {}]
  %s6 = inlined_call_operand.hbm [shape: f32[128,128], index: 6, kind: input, shape index: {}]
  %s7 = inlined_call_operand.vmem [shape: f32[1,128], index: 7, kind: input, shape index: {}]
  %s8 = inlined_call_operand.hbm [shape: f32[8,128], index: 8, kind: output, shape index: {0}]
  %s9 = inlined_call_operand.hbm [shape: f32[8,128], index: 9, kind: output, shape index: {1}]
  %10 = xla_tuple %s8, %s9
  %s11 = sld [smem:[#allocation0]]
  $region70: #{tpu_custom_call.1} parent=0
    _
  %s13 = ssub.s32 1, %s11
  %s14 = scalar_select 0, %s13, %s11
  $region1: #{tpu_custom_call.1} parent=0
    #allocation2 [shape = 'u8[32768]{0}', space=vmem, size = 0x8000, scoped, tag = 'input window, operand 0, single buffered']
    #allocation3 [shape = 's32[1]{0}', space=sflag, size = 0x4, scoped, tag = 'scoped memory for tpu_custom_call.1']
    #allocation4 [shape = 's32[1]{0}', space=sflag, size = 0x4, scoped, tag = 'scoped memory for tpu_custom_call.1']
    #allocation5 [shape = 'u8[4096]{0}', space=vmem, size = 0x1000, scoped, tag = 'input window, operand 1, single buffered']
    #allocation6 [shape = 's32[1]{0}', space=sflag, size = 0x4, scoped, tag = 'scoped memory for tpu_custom_call.1']
    #allocation7 [shape = 'u8[196608]{0}', space=vmem, size = 0x30000, scoped, tag = 'input window, operand 2, single buffered']
    #allocation8 [shape = 'u8[196608]{0}', space=vmem, size = 0x30000, scoped, tag = 'input window, operand 3, single buffered']
    #allocation9 [shape = 's32[1]{0}', space=sflag, size = 0x4, scoped, tag = 'scoped memory for tpu_custom_call.1']
    #allocation10 [shape = 'u8[65536]{0}', space=vmem, size = 0x10000, scoped, tag = 'input window, operand 6, single buffered']
    #allocation11 [shape = 'u8[4096]{0}', space=vmem, size = 0x1000, scoped, tag = 'output window, operand 0, single buffered']
    #allocation12 [shape = 'u8[4096]{0}', space=vmem, size = 0x1000, scoped, tag = 'output window, operand 1, single buffered']
    #allocation13 [shape = 's32[1]{0}', space=sflag, size = 0x4, scoped, tag = 'scoped memory for tpu_custom_call.1']
    %15 = vsyncpa [#allocation3], 0
    %16 = vsyncpa [#allocation6], 0
    %17 = vsyncpa [#allocation9], 0
    %18 = vsyncpa [#allocation4], 0
    %19 = vsyncpa [#allocation13], 0
    // Predicated region
    $region2: #{tpu_custom_call.1} parent=1 // pred_check
      _
    $region3: #{tpu_custom_call.1} parent=1 // pred_check_branch
      %21 = sbr.rel (0) target = $region5
    $region4: #{tpu_custom_call.1} parent=1 // pred_region
      %s23 = ssub.s32 1024, 1024
      %24 = vsyncadd [#allocation3], %s23
      %s25 = sshll.u32 [#allocation2], 4
      %s26 = int_to_ptr.vmem [resolvable:$true] %s25
      %31 = dma.hbm_to_vmem [thread:$0]  %s0, 1024, %s26, [#allocation3], 128, 128, 8
    $region5: #{tpu_custom_call.1} parent=1 // pred_fallthru
      _
    // Predicated region
    $region6: #{tpu_custom_call.1} parent=1 // pred_check
      _
    $region7: #{tpu_custom_call.1} parent=1 // pred_check_branch
      %33 = sbr.rel (0) target = $region9
    $region8: #{tpu_custom_call.1} parent=1 // pred_region
      %s35 = ssub.s32 128, 128
      %36 = vsyncadd [#allocation6], %s35
      %s38 = sshll.u32 [#allocation5], 4
      %s39 = int_to_ptr.vmem [resolvable:$true] %s38
      %41 = dma.hbm_to_vmem [thread:$0]  %s1, 128, %s39, [#allocation6]
    $region9: #{tpu_custom_call.1} parent=1 // pred_fallthru
      _
    // Predicated region
    $region10: #{tpu_custom_call.1} parent=1 // pred_check
      _
    $region11: #{tpu_custom_call.1} parent=1 // pred_check_branch
      %43 = sbr.rel (0) target = $region13
    $region12: #{tpu_custom_call.1} parent=1 // pred_region
      %s45 = ssub.s32 6144, 6144
      %46 = vsyncadd [#allocation6], %s45
      %s47 = sshll.u32 [#allocation7], 4
      %s48 = int_to_ptr.vmem [resolvable:$true] %s47
      %53 = dma.hbm_to_vmem [thread:$0]  %s2, 6144, %s48, [#allocation6], 384, 384, 24
    $region13: #{tpu_custom_call.1} parent=1 // pred_fallthru
      _
    // Predicated region
    $region14: #{tpu_custom_call.1} parent=1 // pred_check
      _
    $region15: #{tpu_custom_call.1} parent=1 // pred_check_branch
      %55 = sbr.rel (0) target = $region17
    $region16: #{tpu_custom_call.1} parent=1 // pred_region
      %s57 = ssub.s32 6144, 6144
      %58 = vsyncadd [#allocation9], %s57
      %s59 = sshll.u32 [#allocation8], 4
      %s60 = int_to_ptr.vmem [resolvable:$true] %s59
      %65 = dma.hbm_to_vmem [thread:$0]  %s3, 6144, %s60, [#allocation9], 384, 384, 24
    $region17: #{tpu_custom_call.1} parent=1 // pred_fallthru
      _
    // Predicated region
    $region18: #{tpu_custom_call.1} parent=1 // pred_check
      _
    $region19: #{tpu_custom_call.1} parent=1 // pred_check_branch
      %67 = sbr.rel (0) target = $region21
    $region20: #{tpu_custom_call.1} parent=1 // pred_region
      _
    $region21: #{tpu_custom_call.1} parent=1 // pred_fallthru
      _
    // Predicated region
    $region22: #{tpu_custom_call.1} parent=1 // pred_check
      _
    $region23: #{tpu_custom_call.1} parent=1 // pred_check_branch
      %69 = sbr.rel (0) target = $region25
    $region24: #{tpu_custom_call.1} parent=1 // pred_region
      _
    $region25: #{tpu_custom_call.1} parent=1 // pred_fallthru
      _
    // Predicated region
    $region26: #{tpu_custom_call.1} parent=1 // pred_check
      _
    $region27: #{tpu_custom_call.1} parent=1 // pred_check_branch
      %71 = sbr.rel (0) target = $region29
    $region28: #{tpu_custom_call.1} parent=1 // pred_region
      %s73 = ssub.s32 2048, 2048
      %74 = vsyncadd [#allocation9], %s73
      %s75 = sshll.u32 [#allocation10], 4
      %s76 = int_to_ptr.vmem [resolvable:$true] %s75
      %81 = dma.hbm_to_vmem [thread:$0]  %s6, 2048, %s76, [#allocation9], 128, 128, 8
    $region29: #{tpu_custom_call.1} parent=1 // pred_fallthru
      _
    // Predicated region
    $region30: #{tpu_custom_call.1} parent=1 // pred_check
      _
    $region31: #{tpu_custom_call.1} parent=1 // pred_check_branch
      %83 = sbr.rel (0) target = $region33
    $region32: #{tpu_custom_call.1} parent=1 // pred_region
      _
    $region33: #{tpu_custom_call.1} parent=1 // pred_fallthru
      _
    // Predicated region
    $region34: #{tpu_custom_call.1} parent=1 // pred_check
      _
    $region35: #{tpu_custom_call.1} parent=1 // pred_check_branch
      %85 = sbr.rel (0) target = $region37
    $region36: #{tpu_custom_call.1} parent=1 // pred_region
      %86 = dma.done [#allocation3], 1024
    $region37: #{tpu_custom_call.1} parent=1 // pred_fallthru
      _
    // Predicated region
    $region38: #{tpu_custom_call.1} parent=1 // pred_check
      _
    $region39: #{tpu_custom_call.1} parent=1 // pred_check_branch
      %88 = sbr.rel (0) target = $region41
    $region40: #{tpu_custom_call.1} parent=1 // pred_region
      %89 = dma.done [#allocation6], 128
    $region41: #{tpu_custom_call.1} parent=1 // pred_fallthru
      _
    // Predicated region
    $region42: #{tpu_custom_call.1} parent=1 // pred_check
      _
    $region43: #{tpu_custom_call.1} parent=1 // pred_check_branch
      %91 = sbr.rel (0) target = $region45
    $region44: #{tpu_custom_call.1} parent=1 // pred_region
      %92 = dma.done [#allocation6], 6144
    $region45: #{tpu_custom_call.1} parent=1 // pred_fallthru
      _
    // Predicated region
    $region46: #{tpu_custom_call.1} parent=1 // pred_check
      _
    $region47: #{tpu_custom_call.1} parent=1 // pred_check_branch
      %94 = sbr.rel (0) target = $region49
    $region48: #{tpu_custom_call.1} parent=1 // pred_region
      %95 = dma.done [#allocation9], 6144
    $region49: #{tpu_custom_call.1} parent=1 // pred_fallthru
      _
    // Predicated region
    $region50: #{tpu_custom_call.1} parent=1 // pred_check
      _
    $region51: #{tpu_custom_call.1} parent=1 // pred_check_branch
      %97 = sbr.rel (0) target = $region53
    $region52: #{tpu_custom_call.1} parent=1 // pred_region
      %98 = dma.done [#allocation9], 2048
    $region53: #{tpu_custom_call.1} parent=1 // pred_fallthru
      _
    %v99 = vld [vmem:[#allocation2] sm:$0xff]
    %v100 = vld [vmem:[#allocation2 + $0x8] sm:$0xff]
    %v101 = vld [vmem:[#allocation2 + $0x10] sm:$0xff]
    %v102 = vld [vmem:[#allocation2 + $0x18] sm:$0xff]
    %v103 = vld [vmem:[#allocation2 + $0x20] sm:$0xff]
    %v104 = vld [vmem:[#allocation2 + $0x28] sm:$0xff]
    %v105 = vld [vmem:[#allocation2 + $0x30] sm:$0xff]
    %v106 = vld [vmem:[#allocation2 + $0x38] sm:$0xff]
    %v107 = vld [vmem:[#allocation7] sm:$0xff]
    %v108 = vld [vmem:[#allocation7 + $0x8] sm:$0xff]
    %v109 = vld [vmem:[#allocation7 + $0x10] sm:$0xff]
    %v110 = vld [vmem:[#allocation7 + $0x18] sm:$0xff]
    %v111 = vld [vmem:[#allocation7 + $0x20] sm:$0xff]
    %v112 = vld [vmem:[#allocation7 + $0x28] sm:$0xff]
    %v113 = vld [vmem:[#allocation7 + $0x30] sm:$0xff]
    %v114 = vld [vmem:[#allocation7 + $0x38] sm:$0xff]
    %v115 = vld [vmem:[#allocation7 + $0x40] sm:$0xff]
    %v116 = vld [vmem:[#allocation7 + $0x48] sm:$0xff]
    %v117 = vld [vmem:[#allocation7 + $0x50] sm:$0xff]
    %v118 = vld [vmem:[#allocation7 + $0x58] sm:$0xff]
    %v119 = vld [vmem:[#allocation7 + $0x60] sm:$0xff]
    %v120 = vld [vmem:[#allocation7 + $0x68] sm:$0xff]
    %v121 = vld [vmem:[#allocation7 + $0x70] sm:$0xff]
    %v122 = vld [vmem:[#allocation7 + $0x78] sm:$0xff]
    %v123 = vld [vmem:[#allocation7 + $0x80] sm:$0xff]
    %v124 = vld [vmem:[#allocation7 + $0x88] sm:$0xff]
    %v125 = vld [vmem:[#allocation7 + $0x90] sm:$0xff]
    %v126 = vld [vmem:[#allocation7 + $0x98] sm:$0xff]
    %v127 = vld [vmem:[#allocation7 + $0xa0] sm:$0xff]
    %v128 = vld [vmem:[#allocation7 + $0xa8] sm:$0xff]
    %v129 = vld [vmem:[#allocation7 + $0xb0] sm:$0xff]
    %v130 = vld [vmem:[#allocation7 + $0xb8] sm:$0xff]
    %v131 = vld [vmem:[#allocation7 + $0xc0] sm:$0xff]
    %v132 = vld [vmem:[#allocation7 + $0xc8] sm:$0xff]
    %v133 = vld [vmem:[#allocation7 + $0xd0] sm:$0xff]
    %v134 = vld [vmem:[#allocation7 + $0xd8] sm:$0xff]
    %v135 = vld [vmem:[#allocation7 + $0xe0] sm:$0xff]
    %v136 = vld [vmem:[#allocation7 + $0xe8] sm:$0xff]
    %v137 = vld [vmem:[#allocation7 + $0xf0] sm:$0xff]
    %v138 = vld [vmem:[#allocation7 + $0xf8] sm:$0xff]
    %v139 = vld [vmem:[#allocation7 + $0x100] sm:$0xff]
    %v140 = vld [vmem:[#allocation7 + $0x108] sm:$0xff]
    %v141 = vld [vmem:[#allocation7 + $0x110] sm:$0xff]
    %v142 = vld [vmem:[#allocation7 + $0x118] sm:$0xff]
    %v143 = vld [vmem:[#allocation7 + $0x120] sm:$0xff]
    %v144 = vld [vmem:[#allocation7 + $0x128] sm:$0xff]
    %v145 = vld [vmem:[#allocation7 + $0x130] sm:$0xff]
    %v146 = vld [vmem:[#allocation7 + $0x138] sm:$0xff]
    %v147 = vld [vmem:[#allocation7 + $0x140] sm:$0xff]
    %v148 = vld [vmem:[#allocation7 + $0x148] sm:$0xff]
    %v149 = vld [vmem:[#allocation7 + $0x150] sm:$0xff]
    %v150 = vld [vmem:[#allocation7 + $0x158] sm:$0xff]
    %v151 = vld [vmem:[#allocation7 + $0x160] sm:$0xff]
    %v152 = vld [vmem:[#allocation7 + $0x168] sm:$0xff]
    %v153 = vld [vmem:[#allocation7 + $0x170] sm:$0xff]
    %v154 = vld [vmem:[#allocation7 + $0x178] sm:$0xff]
    %v155 = vld [vmem:[%s4] sm:$0x7]
    %v157 = vlaneseq
    %v158 = vshrl.u32 %v157, 7
    %v159 = vsub.s32 0, %v158
    %v160 = vrot.slane %v155, %v159
    %v161 = vlaneseq
    %v162 = vshrl.u32 %v161, 7
    %v163 = vsub.s32 1, %v162
    %v164 = vrot.slane %v155, %v163
    %v165 = vlaneseq
    %v166 = vshrl.u32 %v165, 7
    %v167 = vsub.s32 2, %v166
    %v168 = vrot.slane %v155, %v167
    %172 = vmatprep.subr.mxu0 %v108
    %173 = vmatpush1.msra.mxu0 %v107
    %174 = vmatprep.subr.mxu0 %v111
    %175 = vmatpush1.msra.mxu0 %v110
    %176 = vmatprep.subr.mxu0 %v114
    %177 = vmatpush1.msra.mxu0 %v113
    %178 = vmatprep.subr.mxu0 %v117
    %179 = vmatpush1.msra.mxu0 %v116
    %180 = vmatprep.subr.mxu0 %v120
    %181 = vmatpush1.msra.mxu0 %v119
    %182 = vmatprep.subr.mxu0 %v123
    %183 = vmatpush1.msra.mxu0 %v122
    %184 = vmatprep.subr.mxu0 %v126
    %185 = vmatpush1.msra.mxu0 %v125
    %186 = vmatprep.subr.mxu0 %v129
    %187 = vmatpush1.msra.mxu0 %v128
    %188 = vmatprep.subr.mxu0 %v132
    %189 = vmatpush1.msra.mxu0 %v131
    %190 = vmatprep.subr.mxu0 %v135
    %191 = vmatpush1.msra.mxu0 %v134
    %192 = vmatprep.subr.mxu0 %v138
    %193 = vmatpush1.msra.mxu0 %v137
    %194 = vmatprep.subr.mxu0 %v141
    %195 = vmatpush1.msra.mxu0 %v140
    %196 = vmatprep.subr.mxu0 %v144
    %197 = vmatpush1.msra.mxu0 %v143
    %198 = vmatprep.subr.mxu0 %v147
    %199 = vmatpush1.msra.mxu0 %v146
    %200 = vmatprep.subr.mxu0 %v150
    %201 = vmatpush1.msra.mxu0 %v149
    %202 = vmatprep.subr.mxu0 %v153
    %203 = vmatpush1.msra.mxu0 %v152
    %204 = vmatprep.subr.mxu0 0.0
    %205 = vmatpush1.msra.mxu0 0.0
    %206 = vmatprep.subr.mxu0 0.0
    %207 = vmatpush1.msra.mxu0 0.0
    %208 = vmatprep.subr.mxu0 0.0
    %209 = vmatpush1.msra.mxu0 0.0
    %210 = vmatprep.subr.mxu0 0.0
    %211 = vmatpush1.msra.mxu0 0.0
    %212 = vmatprep.subr.mxu0 0.0
    %213 = vmatpush1.msra.mxu0 0.0
    %214 = vmatprep.subr.mxu0 0.0
    %215 = vmatpush1.msra.mxu0 0.0
    %216 = vmatprep.subr.mxu0 0.0
    %217 = vmatpush1.msra.mxu0 0.0
    %218 = vmatprep.subr.mxu0 0.0
    %219 = vmatpush1.msra.mxu0 0.0
    %220 = vmatprep.subr.mxu0 0.0
    %221 = vmatpush1.msra.mxu0 0.0
    %222 = vmatprep.subr.mxu0 0.0
    %223 = vmatpush1.msra.mxu0 0.0
    %224 = vmatprep.subr.mxu0 0.0
    %225 = vmatpush1.msra.mxu0 0.0
    %226 = vmatprep.subr.mxu0 0.0
    %227 = vmatpush1.msra.mxu0 0.0
    %228 = vmatprep.subr.mxu0 0.0
    %229 = vmatpush1.msra.mxu0 0.0
    %230 = vmatprep.subr.mxu0 0.0
    %231 = vmatpush1.msra.mxu0 0.0
    %232 = vmatprep.subr.mxu0 0.0
    %233 = vmatpush1.msra.mxu0 0.0
    %234 = vmatprep.subr.mxu0 0.0
    %235 = vmatpush1.msra.mxu0 0.0
    %236 = vmatprep.mubr.f32.mxu0 0.0
    %237 = vmatmul.mubr.f32.gmra.mrb[0].mxu0 %v99
    %v238 = vpop.f32.mrb[0].mxu0
    %v239 = vadd.f32 %v160, %v238
    %v240 = vpop.f32.mrb[0].mxu0
    %v241 = vadd.f32 %v164, %v240
    %242 = vmatprep.mubr.f32.mxu0 0.0
    %243 = vmatmul.mubr.f32.gmra.mrb[0].mxu0 %v100
    %v244 = vpop.f32.mrb[0].mxu0
    %v245 = vadd.f32 %v160, %v244
    %v246 = vpop.f32.mrb[0].mxu0
    %v247 = vadd.f32 %v164, %v246
    %248 = vmatprep.mubr.f32.mxu0 0.0
    %249 = vmatmul.mubr.f32.gmra.mrb[0].mxu0 %v101
    %v250 = vpop.f32.mrb[0].mxu0
    %v251 = vadd.f32 %v160, %v250
    %v252 = vpop.f32.mrb[0].mxu0
    %v253 = vadd.f32 %v164, %v252
    %254 = vmatprep.mubr.f32.mxu0 0.0
    %255 = vmatmul.mubr.f32.gmra.mrb[0].mxu0 %v102
    %v256 = vpop.f32.mrb[0].mxu0
    %v257 = vadd.f32 %v160, %v256
    %v258 = vpop.f32.mrb[0].mxu0
    %v259 = vadd.f32 %v164, %v258
    %260 = vmatprep.mubr.f32.mxu0 0.0
    %261 = vmatmul.mubr.f32.gmra.mrb[0].mxu0 %v103
    %v262 = vpop.f32.mrb[0].mxu0
    %v263 = vadd.f32 %v160, %v262
    %v264 = vpop.f32.mrb[0].mxu0
    %v265 = vadd.f32 %v164, %v264
    %266 = vmatprep.mubr.f32.mxu0 0.0
    %267 = vmatmul.mubr.f32.gmra.mrb[0].mxu0 %v104
    %v268 = vpop.f32.mrb[0].mxu0
    %v269 = vadd.f32 %v160, %v268
    %v270 = vpop.f32.mrb[0].mxu0
    %v271 = vadd.f32 %v164, %v270
    %272 = vmatprep.mubr.f32.mxu0 0.0
    %273 = vmatmul.mubr.f32.gmra.mrb[0].mxu0 %v105
    %v274 = vpop.f32.mrb[0].mxu0
    %v275 = vadd.f32 %v160, %v274
    %v276 = vpop.f32.mrb[0].mxu0
    %v277 = vadd.f32 %v164, %v276
    %278 = vmatprep.mubr.f32.mxu0 0.0
    %279 = vmatmul.mubr.f32.gmra.mrb[0].mxu0 %v106
    %v280 = vpop.f32.mrb[0].mxu0
    %v281 = vadd.f32 %v160, %v280
    %v282 = vpop.f32.mrb[0].mxu0
    %v283 = vadd.f32 %v164, %v282
    %284 = vdwg.mxu0
    %285 = vmatprep.subr.mxu0 0.0
    %286 = vmatpush1.msra.mxu0 %v109
    %287 = vmatprep.subr.mxu0 0.0
    %288 = vmatpush1.msra.mxu0 %v112
    %289 = vmatprep.subr.mxu0 0.0
    %290 = vmatpush1.msra.mxu0 %v115
    %291 = vmatprep.subr.mxu0 0.0
    %292 = vmatpush1.msra.mxu0 %v118
    %293 = vmatprep.subr.mxu0 0.0
    %294 = vmatpush1.msra.mxu0 %v121
    %295 = vmatprep.subr.mxu0 0.0
    %296 = vmatpush1.msra.mxu0 %v124
    %297 = vmatprep.subr.mxu0 0.0
    %298 = vmatpush1.msra.mxu0 %v127
    %299 = vmatprep.subr.mxu0 0.0
    %300 = vmatpush1.msra.mxu0 %v130
    %301 = vmatprep.subr.mxu0 0.0
    %302 = vmatpush1.msra.mxu0 %v133
    %303 = vmatprep.subr.mxu0 0.0
    %304 = vmatpush1.msra.mxu0 %v136
    %305 = vmatprep.subr.mxu0 0.0
    %306 = vmatpush1.msra.mxu0 %v139
    %307 = vmatprep.subr.mxu0 0.0
    %308 = vmatpush1.msra.mxu0 %v142
    %309 = vmatprep.subr.mxu0 0.0
    %310 = vmatpush1.msra.mxu0 %v145
    %311 = vmatprep.subr.mxu0 0.0
    %312 = vmatpush1.msra.mxu0 %v148
    %313 = vmatprep.subr.mxu0 0.0
    %314 = vmatpush1.msra.mxu0 %v151
    %315 = vmatprep.subr.mxu0 0.0
    %316 = vmatpush1.msra.mxu0 %v154
    %317 = vmatprep.subr.mxu0 0.0
    %318 = vmatpush1.msra.mxu0 0.0
    %319 = vmatprep.subr.mxu0 0.0
    %320 = vmatpush1.msra.mxu0 0.0
    %321 = vmatprep.subr.mxu0 0.0
    %322 = vmatpush1.msra.mxu0 0.0
    %323 = vmatprep.subr.mxu0 0.0
    %324 = vmatpush1.msra.mxu0 0.0
    %325 = vmatprep.subr.mxu0 0.0
    %326 = vmatpush1.msra.mxu0 0.0
    %327 = vmatprep.subr.mxu0 0.0
    %328 = vmatpush1.msra.mxu0 0.0
    %329 = vmatprep.subr.mxu0 0.0
    %330 = vmatpush1.msra.mxu0 0.0
    %331 = vmatprep.subr.mxu0 0.0
    %332 = vmatpush1.msra.mxu0 0.0
    %333 = vmatprep.subr.mxu0 0.0
    %334 = vmatpush1.msra.mxu0 0.0
    %335 = vmatprep.subr.mxu0 0.0
    %336 = vmatpush1.msra.mxu0 0.0
    %337 = vmatprep.subr.mxu0 0.0
    %338 = vmatpush1.msra.mxu0 0.0
    %339 = vmatprep.subr.mxu0 0.0
    %340 = vmatpush1.msra.mxu0 0.0
    %341 = vmatprep.subr.mxu0 0.0
    %342 = vmatpush1.msra.mxu0 0.0
    %343 = vmatprep.subr.mxu0 0.0
    %344 = vmatpush1.msra.mxu0 0.0
    %345 = vmatprep.subr.mxu0 0.0
    %346 = vmatpush1.msra.mxu0 0.0
    %347 = vmatprep.subr.mxu0 0.0
    %348 = vmatpush1.msra.mxu0 0.0
    %349 = vmatprep.mubr.f32.mxu0 0.0
    %350 = vmatmul.mubr.f32.gmra.mrb[0].mxu0 %v99
    %v351 = vpop.f32.mrb[0].mxu0
    %v352 = vadd.f32 %v168, %v351
    %v353 = vpop.f32.mrb[0].mxu0
    %354 = vmatprep.mubr.f32.mxu0 0.0
    %355 = vmatmul.mubr.f32.gmra.mrb[0].mxu0 %v100
    %v356 = vpop.f32.mrb[0].mxu0
    %v357 = vadd.f32 %v168, %v356
    %v358 = vpop.f32.mrb[0].mxu0
    %359 = vmatprep.mubr.f32.mxu0 0.0
    %360 = vmatmul.mubr.f32.gmra.mrb[0].mxu0 %v101
    %v361 = vpop.f32.mrb[0].mxu0
    %v362 = vadd.f32 %v168, %v361
    %v363 = vpop.f32.mrb[0].mxu0
    %364 = vmatprep.mubr.f32.mxu0 0.0
    %365 = vmatmul.mubr.f32.gmra.mrb[0].mxu0 %v102
    %v366 = vpop.f32.mrb[0].mxu0
    %v367 = vadd.f32 %v168, %v366
    %v368 = vpop.f32.mrb[0].mxu0
    %369 = vmatprep.mubr.f32.mxu0 0.0
    %370 = vmatmul.mubr.f32.gmra.mrb[0].mxu0 %v103
    %v371 = vpop.f32.mrb[0].mxu0
    %v372 = vadd.f32 %v168, %v371
    %v373 = vpop.f32.mrb[0].mxu0
    %374 = vmatprep.mubr.f32.mxu0 0.0
    %375 = vmatmul.mubr.f32.gmra.mrb[0].mxu0 %v104
    %v376 = vpop.f32.mrb[0].mxu0
    %v377 = vadd.f32 %v168, %v376
    %v378 = vpop.f32.mrb[0].mxu0
    %379 = vmatprep.mubr.f32.mxu0 0.0
    %380 = vmatmul.mubr.f32.gmra.mrb[0].mxu0 %v105
    %v381 = vpop.f32.mrb[0].mxu0
    %v382 = vadd.f32 %v168, %v381
    %v383 = vpop.f32.mrb[0].mxu0
    %384 = vmatprep.mubr.f32.mxu0 0.0
    %385 = vmatmul.mubr.f32.gmra.mrb[0].mxu0 %v106
    %v386 = vpop.f32.mrb[0].mxu0
    %v387 = vadd.f32 %v168, %v386
    %v388 = vpop.f32.mrb[0].mxu0
    %389 = vdwg.mxu0
    %v390 = vld [vmem:[#allocation8] sm:$0xff]
    %v391 = vld [vmem:[#allocation8 + $0x8] sm:$0xff]
    %v392 = vld [vmem:[#allocation8 + $0x10] sm:$0xff]
    %v393 = vld [vmem:[#allocation8 + $0x18] sm:$0xff]
    %v394 = vld [vmem:[#allocation8 + $0x20] sm:$0xff]
    %v395 = vld [vmem:[#allocation8 + $0x28] sm:$0xff]
    %v396 = vld [vmem:[#allocation8 + $0x30] sm:$0xff]
    %v397 = vld [vmem:[#allocation8 + $0x38] sm:$0xff]
    %v398 = vld [vmem:[#allocation8 + $0x40] sm:$0xff]
    %v399 = vld [vmem:[#allocation8 + $0x48] sm:$0xff]
    %v400 = vld [vmem:[#allocation8 + $0x50] sm:$0xff]
    %v401 = vld [vmem:[#allocation8 + $0x58] sm:$0xff]
    %v402 = vld [vmem:[#allocation8 + $0x60] sm:$0xff]
    %v403 = vld [vmem:[#allocation8 + $0x68] sm:$0xff]
    %v404 = vld [vmem:[#allocation8 + $0x70] sm:$0xff]
    %v405 = vld [vmem:[#allocation8 + $0x78] sm:$0xff]
    %v406 = vld [vmem:[#allocation8 + $0x80] sm:$0xff]
    %v407 = vld [vmem:[#allocation8 + $0x88] sm:$0xff]
    %v408 = vld [vmem:[#allocation8 + $0x90] sm:$0xff]
    %v409 = vld [vmem:[#allocation8 + $0x98] sm:$0xff]
    %v410 = vld [vmem:[#allocation8 + $0xa0] sm:$0xff]
    %v411 = vld [vmem:[#allocation8 + $0xa8] sm:$0xff]
    %v412 = vld [vmem:[#allocation8 + $0xb0] sm:$0xff]
    %v413 = vld [vmem:[#allocation8 + $0xb8] sm:$0xff]
    %v414 = vld [vmem:[#allocation8 + $0xc0] sm:$0xff]
    %v415 = vld [vmem:[#allocation8 + $0xc8] sm:$0xff]
    %v416 = vld [vmem:[#allocation8 + $0xd0] sm:$0xff]
    %v417 = vld [vmem:[#allocation8 + $0xd8] sm:$0xff]
    %v418 = vld [vmem:[#allocation8 + $0xe0] sm:$0xff]
    %v419 = vld [vmem:[#allocation8 + $0xe8] sm:$0xff]
    %v420 = vld [vmem:[#allocation8 + $0xf0] sm:$0xff]
    %v421 = vld [vmem:[#allocation8 + $0xf8] sm:$0xff]
    %v422 = vld [vmem:[#allocation8 + $0x100] sm:$0xff]
    %v423 = vld [vmem:[#allocation8 + $0x108] sm:$0xff]
    %v424 = vld [vmem:[#allocation8 + $0x110] sm:$0xff]
    %v425 = vld [vmem:[#allocation8 + $0x118] sm:$0xff]
    %v426 = vld [vmem:[#allocation8 + $0x120] sm:$0xff]
    %v427 = vld [vmem:[#allocation8 + $0x128] sm:$0xff]
    %v428 = vld [vmem:[#allocation8 + $0x130] sm:$0xff]
    %v429 = vld [vmem:[#allocation8 + $0x138] sm:$0xff]
    %v430 = vld [vmem:[#allocation8 + $0x140] sm:$0xff]
    %v431 = vld [vmem:[#allocation8 + $0x148] sm:$0xff]
    %v432 = vld [vmem:[#allocation8 + $0x150] sm:$0xff]
    %v433 = vld [vmem:[#allocation8 + $0x158] sm:$0xff]
    %v434 = vld [vmem:[#allocation8 + $0x160] sm:$0xff]
    %v435 = vld [vmem:[#allocation8 + $0x168] sm:$0xff]
    %v436 = vld [vmem:[#allocation8 + $0x170] sm:$0xff]
    %v437 = vld [vmem:[#allocation8 + $0x178] sm:$0xff]
    %v438 = vld [vmem:[%s5] sm:$0x7]
    %v440 = vlaneseq
    %v441 = vshrl.u32 %v440, 7
    %v442 = vsub.s32 0, %v441
    %v443 = vrot.slane %v438, %v442
    %v444 = vlaneseq
    %v445 = vshrl.u32 %v444, 7
    %v446 = vsub.s32 1, %v445
    %v447 = vrot.slane %v438, %v446
    %v448 = vlaneseq
    %v449 = vshrl.u32 %v448, 7
    %v450 = vsub.s32 2, %v449
    %v451 = vrot.slane %v438, %v450
    %v455 = vld [vmem:[#allocation5] sm:$0xff]
    %456 = vmatprep.subr.mxu0 %v391
    %457 = vmatpush1.msra.mxu0 %v390
    %458 = vmatprep.subr.mxu0 %v394
    %459 = vmatpush1.msra.mxu0 %v393
    %460 = vmatprep.subr.mxu0 %v397
    %461 = vmatpush1.msra.mxu0 %v396
    %462 = vmatprep.subr.mxu0 %v400
    %463 = vmatpush1.msra.mxu0 %v399
    %464 = vmatprep.subr.mxu0 %v403
    %465 = vmatpush1.msra.mxu0 %v402
    %466 = vmatprep.subr.mxu0 %v406
    %467 = vmatpush1.msra.mxu0 %v405
    %468 = vmatprep.subr.mxu0 %v409
    %469 = vmatpush1.msra.mxu0 %v408
    %470 = vmatprep.subr.mxu0 %v412
    %471 = vmatpush1.msra.mxu0 %v411
    %472 = vmatprep.subr.mxu0 %v415
    %473 = vmatpush1.msra.mxu0 %v414
    %474 = vmatprep.subr.mxu0 %v418
    %475 = vmatpush1.msra.mxu0 %v417
    %476 = vmatprep.subr.mxu0 %v421
    %477 = vmatpush1.msra.mxu0 %v420
    %478 = vmatprep.subr.mxu0 %v424
    %479 = vmatpush1.msra.mxu0 %v423
    %480 = vmatprep.subr.mxu0 %v427
    %481 = vmatpush1.msra.mxu0 %v426
    %482 = vmatprep.subr.mxu0 %v430
    %483 = vmatpush1.msra.mxu0 %v429
    %484 = vmatprep.subr.mxu0 %v433
    %485 = vmatpush1.msra.mxu0 %v432
    %486 = vmatprep.subr.mxu0 %v436
    %487 = vmatpush1.msra.mxu0 %v435
    %488 = vmatprep.subr.mxu0 0.0
    %489 = vmatpush1.msra.mxu0 0.0
    %490 = vmatprep.subr.mxu0 0.0
    %491 = vmatpush1.msra.mxu0 0.0
    %492 = vmatprep.subr.mxu0 0.0
    %493 = vmatpush1.msra.mxu0 0.0
    %494 = vmatprep.subr.mxu0 0.0
    %495 = vmatpush1.msra.mxu0 0.0
    %496 = vmatprep.subr.mxu0 0.0
    %497 = vmatpush1.msra.mxu0 0.0
    %498 = vmatprep.subr.mxu0 0.0
    %499 = vmatpush1.msra.mxu0 0.0
    %500 = vmatprep.subr.mxu0 0.0
    %501 = vmatpush1.msra.mxu0 0.0
    %502 = vmatprep.subr.mxu0 0.0
    %503 = vmatpush1.msra.mxu0 0.0
    %504 = vmatprep.subr.mxu0 0.0
    %505 = vmatpush1.msra.mxu0 0.0
    %506 = vmatprep.subr.mxu0 0.0
    %507 = vmatpush1.msra.mxu0 0.0
    %508 = vmatprep.subr.mxu0 0.0
    %509 = vmatpush1.msra.mxu0 0.0
    %510 = vmatprep.subr.mxu0 0.0
    %511 = vmatpush1.msra.mxu0 0.0
    %512 = vmatprep.subr.mxu0 0.0
    %513 = vmatpush1.msra.mxu0 0.0
    %514 = vmatprep.subr.mxu0 0.0
    %515 = vmatpush1.msra.mxu0 0.0
    %516 = vmatprep.subr.mxu0 0.0
    %517 = vmatpush1.msra.mxu0 0.0
    %518 = vmatprep.subr.mxu0 0.0
    %519 = vmatpush1.msra.mxu0 0.0
    %520 = vmatprep.mubr.f32.mxu0 0.0
    %521 = vmatmul.mubr.f32.gmra.mrb[0].mxu0 %v455
    %v522 = vpop.f32.mrb[0].mxu0
    %v523 = vadd.f32 %v443, %v522
    %v524 = vpop.f32.mrb[0].mxu0
    %v525 = vadd.f32 %v447, %v524
    %526 = vdwg.mxu0
    %527 = vmatprep.subr.mxu0 0.0
    %528 = vmatpush1.msra.mxu0 %v392
    %529 = vmatprep.subr.mxu0 0.0
    %530 = vmatpush1.msra.mxu0 %v395
    %531 = vmatprep.subr.mxu0 0.0
    %532 = vmatpush1.msra.mxu0 %v398
    %533 = vmatprep.subr.mxu0 0.0
    %534 = vmatpush1.msra.mxu0 %v401
    %535 = vmatprep.subr.mxu0 0.0
    %536 = vmatpush1.msra.mxu0 %v404
    %537 = vmatprep.subr.mxu0 0.0
    %538 = vmatpush1.msra.mxu0 %v407
    %539 = vmatprep.subr.mxu0 0.0
    %540 = vmatpush1.msra.mxu0 %v410
    %541 = vmatprep.subr.mxu0 0.0
    %542 = vmatpush1.msra.mxu0 %v413
    %543 = vmatprep.subr.mxu0 0.0
    %544 = vmatpush1.msra.mxu0 %v416
    %545 = vmatprep.subr.mxu0 0.0
    %546 = vmatpush1.msra.mxu0 %v419
    %547 = vmatprep.subr.mxu0 0.0
    %548 = vmatpush1.msra.mxu0 %v422
    %549 = vmatprep.subr.mxu0 0.0
    %550 = vmatpush1.msra.mxu0 %v425
    %551 = vmatprep.subr.mxu0 0.0
    %552 = vmatpush1.msra.mxu0 %v428
    %553 = vmatprep.subr.mxu0 0.0
    %554 = vmatpush1.msra.mxu0 %v431
    %555 = vmatprep.subr.mxu0 0.0
    %556 = vmatpush1.msra.mxu0 %v434
    %557 = vmatprep.subr.mxu0 0.0
    %558 = vmatpush1.msra.mxu0 %v437
    %559 = vmatprep.subr.mxu0 0.0
    %560 = vmatpush1.msra.mxu0 0.0
    %561 = vmatprep.subr.mxu0 0.0
    %562 = vmatpush1.msra.mxu0 0.0
    %563 = vmatprep.subr.mxu0 0.0
    %564 = vmatpush1.msra.mxu0 0.0
    %565 = vmatprep.subr.mxu0 0.0
    %566 = vmatpush1.msra.mxu0 0.0
    %567 = vmatprep.subr.mxu0 0.0
    %568 = vmatpush1.msra.mxu0 0.0
    %569 = vmatprep.subr.mxu0 0.0
    %570 = vmatpush1.msra.mxu0 0.0
    %571 = vmatprep.subr.mxu0 0.0
    %572 = vmatpush1.msra.mxu0 0.0
    %573 = vmatprep.subr.mxu0 0.0
    %574 = vmatpush1.msra.mxu0 0.0
    %575 = vmatprep.subr.mxu0 0.0
    %576 = vmatpush1.msra.mxu0 0.0
    %577 = vmatprep.subr.mxu0 0.0
    %578 = vmatpush1.msra.mxu0 0.0
    %579 = vmatprep.subr.mxu0 0.0
    %580 = vmatpush1.msra.mxu0 0.0
    %581 = vmatprep.subr.mxu0 0.0
    %582 = vmatpush1.msra.mxu0 0.0
    %583 = vmatprep.subr.mxu0 0.0
    %584 = vmatpush1.msra.mxu0 0.0
    %585 = vmatprep.subr.mxu0 0.0
    %586 = vmatpush1.msra.mxu0 0.0
    %587 = vmatprep.subr.mxu0 0.0
    %588 = vmatpush1.msra.mxu0 0.0
    %589 = vmatprep.subr.mxu0 0.0
    %590 = vmatpush1.msra.mxu0 0.0
    %591 = vmatprep.mubr.f32.mxu0 0.0
    %592 = vmatmul.mubr.f32.gmra.mrb[0].mxu0 %v455
    %v593 = vpop.f32.mrb[0].mxu0
    %v594 = vadd.f32 %v451, %v593
    %v595 = vpop.f32.mrb[0].mxu0
    %596 = vdwg.mxu0
    %v597 = vadd.f32 %v239, %v523
    %v598 = vxor.u32 %v597, 2147483648
    %v599 = vmul.f32 %v598, 1.442695
    %v600 = vpow.pop %v599
    %v601 = vadd.f32 %v600, 1.0
    %v602 = vrcp.pop %v601
    %v603 = vmul.f32 1.0, %v602
    %v604 = vadd.f32 %v241, %v525
    %v605 = vxor.u32 %v604, 2147483648
    %v606 = vmul.f32 %v605, 1.442695
    %v607 = vpow.pop %v606
    %v608 = vadd.f32 %v607, 1.0
    %v609 = vrcp.pop %v608
    %v610 = vmul.f32 1.0, %v609
    %v611 = vmul.f32 %v603, %v594
    %v612 = vadd.f32 %v352, %v611
    %v613 = vtanh.pop %v612
    %v614 = vsub.f32 1.0, %v610
    %v615 = vmul.f32 %v614, %v613
    %v616 = vmul.f32 %v610, %v455
    %v617 = vadd.f32 %v615, %v616
    %v618 = vld [vmem:[#allocation10] sm:$0xff]
    %v619 = vld [vmem:[#allocation10 + $0x8] sm:$0xff]
    %v620 = vld [vmem:[#allocation10 + $0x10] sm:$0xff]
    %v621 = vld [vmem:[#allocation10 + $0x18] sm:$0xff]
    %v622 = vld [vmem:[#allocation10 + $0x20] sm:$0xff]
    %v623 = vld [vmem:[#allocation10 + $0x28] sm:$0xff]
    %v624 = vld [vmem:[#allocation10 + $0x30] sm:$0xff]
    %v625 = vld [vmem:[#allocation10 + $0x38] sm:$0xff]
    %v626 = vld [vmem:[#allocation10 + $0x40] sm:$0xff]
    %v627 = vld [vmem:[#allocation10 + $0x48] sm:$0xff]
    %v628 = vld [vmem:[#allocation10 + $0x50] sm:$0xff]
    %v629 = vld [vmem:[#allocation10 + $0x58] sm:$0xff]
    %v630 = vld [vmem:[#allocation10 + $0x60] sm:$0xff]
    %v631 = vld [vmem:[#allocation10 + $0x68] sm:$0xff]
    %v632 = vld [vmem:[#allocation10 + $0x70] sm:$0xff]
    %v633 = vld [vmem:[#allocation10 + $0x78] sm:$0xff]
    %v634 = vld [vmem:[%s7] sm:$0x1]
    %v636 = vlaneseq
    %v637 = vshrl.u32 %v636, 7
    %v638 = vsub.s32 0, %v637
    %v639 = vrot.slane %v634, %v638
    %641 = vmatprep.subr.mxu0 0.0
    %642 = vmatpush1.msra.mxu0 %v618
    %643 = vmatprep.subr.mxu0 0.0
    %644 = vmatpush1.msra.mxu0 %v619
    %645 = vmatprep.subr.mxu0 0.0
    %646 = vmatpush1.msra.mxu0 %v620
    %647 = vmatprep.subr.mxu0 0.0
    %648 = vmatpush1.msra.mxu0 %v621
    %649 = vmatprep.subr.mxu0 0.0
    %650 = vmatpush1.msra.mxu0 %v622
    %651 = vmatprep.subr.mxu0 0.0
    %652 = vmatpush1.msra.mxu0 %v623
    %653 = vmatprep.subr.mxu0 0.0
    %654 = vmatpush1.msra.mxu0 %v624
    %655 = vmatprep.subr.mxu0 0.0
    %656 = vmatpush1.msra.mxu0 %v625
    %657 = vmatprep.subr.mxu0 0.0
    %658 = vmatpush1.msra.mxu0 %v626
    %659 = vmatprep.subr.mxu0 0.0
    %660 = vmatpush1.msra.mxu0 %v627
    %661 = vmatprep.subr.mxu0 0.0
    %662 = vmatpush1.msra.mxu0 %v628
    %663 = vmatprep.subr.mxu0 0.0
    %664 = vmatpush1.msra.mxu0 %v629
    %665 = vmatprep.subr.mxu0 0.0
    %666 = vmatpush1.msra.mxu0 %v630
    %667 = vmatprep.subr.mxu0 0.0
    %668 = vmatpush1.msra.mxu0 %v631
    %669 = vmatprep.subr.mxu0 0.0
    %670 = vmatpush1.msra.mxu0 %v632
    %671 = vmatprep.subr.mxu0 0.0
    %672 = vmatpush1.msra.mxu0 %v633
    %673 = vmatprep.subr.mxu0 0.0
    %674 = vmatpush1.msra.mxu0 0.0
    %675 = vmatprep.subr.mxu0 0.0
    %676 = vmatpush1.msra.mxu0 0.0
    %677 = vmatprep.subr.mxu0 0.0
    %678 = vmatpush1.msra.mxu0 0.0
    %679 = vmatprep.subr.mxu0 0.0
    %680 = vmatpush1.msra.mxu0 0.0
    %681 = vmatprep.subr.mxu0 0.0
    %682 = vmatpush1.msra.mxu0 0.0
    %683 = vmatprep.subr.mxu0 0.0
    %684 = vmatpush1.msra.mxu0 0.0
    %685 = vmatprep.subr.mxu0 0.0
    %686 = vmatpush1.msra.mxu0 0.0
    %687 = vmatprep.subr.mxu0 0.0
    %688 = vmatpush1.msra.mxu0 0.0
    %689 = vmatprep.subr.mxu0 0.0
    %690 = vmatpush1.msra.mxu0 0.0
    %691 = vmatprep.subr.mxu0 0.0
    %692 = vmatpush1.msra.mxu0 0.0
    %693 = vmatprep.subr.mxu0 0.0
    %694 = vmatpush1.msra.mxu0 0.0
    %695 = vmatprep.subr.mxu0 0.0
    %696 = vmatpush1.msra.mxu0 0.0
    %697 = vmatprep.subr.mxu0 0.0
    %698 = vmatpush1.msra.mxu0 0.0
    %699 = vmatprep.subr.mxu0 0.0
    %700 = vmatpush1.msra.mxu0 0.0
    %701 = vmatprep.subr.mxu0 0.0
    %702 = vmatpush1.msra.mxu0 0.0
    %703 = vmatprep.subr.mxu0 0.0
    %704 = vmatpush1.msra.mxu0 0.0
    %705 = vmatprep.mubr.f32.mxu0 0.0
    %706 = vmatmul.mubr.f32.gmra.mrb[0].mxu0 %v617
    %v707 = vpop.f32.mrb[0].mxu0
    %v708 = vadd.f32 %v639, %v707
    %v709 = vpop.f32.mrb[0].mxu0
    %710 = vdwg.mxu0
    %v711 = vmax.f32 %v708, 0.0
    %712 = vst [vmem:[#allocation11] sm:$0xff] %v711
    %713 = vmatprep.subr.mxu0 %v391
    %714 = vmatpush1.msra.mxu0 %v390
    %715 = vmatprep.subr.mxu0 %v394
    %716 = vmatpush1.msra.mxu0 %v393
    %717 = vmatprep.subr.mxu0 %v397
    %718 = vmatpush1.msra.mxu0 %v396
    %719 = vmatprep.subr.mxu0 %v400
    %720 = vmatpush1.msra.mxu0 %v399
    %721 = vmatprep.subr.mxu0 %v403
    %722 = vmatpush1.msra.mxu0 %v402
    %723 = vmatprep.subr.mxu0 %v406
    %724 = vmatpush1.msra.mxu0 %v405
    %725 = vmatprep.subr.mxu0 %v409
    %726 = vmatpush1.msra.mxu0 %v408
    %727 = vmatprep.subr.mxu0 %v412
    %728 = vmatpush1.msra.mxu0 %v411
    %729 = vmatprep.subr.mxu0 %v415
    %730 = vmatpush1.msra.mxu0 %v414
    %731 = vmatprep.subr.mxu0 %v418
    %732 = vmatpush1.msra.mxu0 %v417
    %733 = vmatprep.subr.mxu0 %v421
    %734 = vmatpush1.msra.mxu0 %v420
    %735 = vmatprep.subr.mxu0 %v424
    %736 = vmatpush1.msra.mxu0 %v423
    %737 = vmatprep.subr.mxu0 %v427
    %738 = vmatpush1.msra.mxu0 %v426
    %739 = vmatprep.subr.mxu0 %v430
    %740 = vmatpush1.msra.mxu0 %v429
    %741 = vmatprep.subr.mxu0 %v433
    %742 = vmatpush1.msra.mxu0 %v432
    %743 = vmatprep.subr.mxu0 %v436
    %744 = vmatpush1.msra.mxu0 %v435
    %745 = vmatprep.subr.mxu0 0.0
    %746 = vmatpush1.msra.mxu0 0.0
    %747 = vmatprep.subr.mxu0 0.0
    %748 = vmatpush1.msra.mxu0 0.0
    %749 = vmatprep.subr.mxu0 0.0
    %750 = vmatpush1.msra.mxu0 0.0
    %751 = vmatprep.subr.mxu0 0.0
    %752 = vmatpush1.msra.mxu0 0.0
    %753 = vmatprep.subr.mxu0 0.0
    %754 = vmatpush1.msra.mxu0 0.0
    %755 = vmatprep.subr.mxu0 0.0
    %756 = vmatpush1.msra.mxu0 0.0
    %757 = vmatprep.subr.mxu0 0.0
    %758 = vmatpush1.msra.mxu0 0.0
    %759 = vmatprep.subr.mxu0 0.0
    %760 = vmatpush1.msra.mxu0 0.0
    %761 = vmatprep.subr.mxu0 0.0
    %762 = vmatpush1.msra.mxu0 0.0
    %763 = vmatprep.subr.mxu0 0.0
    %764 = vmatpush1.msra.mxu0 0.0
    %765 = vmatprep.subr.mxu0 0.0
    %766 = vmatpush1.msra.mxu0 0.0
    %767 = vmatprep.subr.mxu0 0.0
    %768 = vmatpush1.msra.mxu0 0.0
    %769 = vmatprep.subr.mxu0 0.0
    %770 = vmatpush1.msra.mxu0 0.0
    %771 = vmatprep.subr.mxu0 0.0
    %772 = vmatpush1.msra.mxu0 0.0
    %773 = vmatprep.subr.mxu0 0.0
    %774 = vmatpush1.msra.mxu0 0.0
    %775 = vmatprep.subr.mxu0 0.0
    %776 = vmatpush1.msra.mxu0 0.0
    %777 = vmatprep.mubr.f32.mxu0 0.0
    %778 = vmatmul.mubr.f32.gmra.mrb[0].mxu0 %v617
    %v779 = vpop.f32.mrb[0].mxu0
    %v780 = vadd.f32 %v443, %v779
    %v781 = vpop.f32.mrb[0].mxu0
    %v782 = vadd.f32 %v447, %v781
    %783 = vdwg.mxu0
    %784 = vmatprep.subr.mxu0 0.0
    %785 = vmatpush1.msra.mxu0 %v392
    %786 = vmatprep.subr.mxu0 0.0
    %787 = vmatpush1.msra.mxu0 %v395
    %788 = vmatprep.subr.mxu0 0.0
    %789 = vmatpush1.msra.mxu0 %v398
    %790 = vmatprep.subr.mxu0 0.0
    %791 = vmatpush1.msra.mxu0 %v401
    %792 = vmatprep.subr.mxu0 0.0
    %793 = vmatpush1.msra.mxu0 %v404
    %794 = vmatprep.subr.mxu0 0.0
    %795 = vmatpush1.msra.mxu0 %v407
    %796 = vmatprep.subr.mxu0 0.0
    %797 = vmatpush1.msra.mxu0 %v410
    %798 = vmatprep.subr.mxu0 0.0
    %799 = vmatpush1.msra.mxu0 %v413
    %800 = vmatprep.subr.mxu0 0.0
    %801 = vmatpush1.msra.mxu0 %v416
    %802 = vmatprep.subr.mxu0 0.0
    %803 = vmatpush1.msra.mxu0 %v419
    %804 = vmatprep.subr.mxu0 0.0
    %805 = vmatpush1.msra.mxu0 %v422
    %806 = vmatprep.subr.mxu0 0.0
    %807 = vmatpush1.msra.mxu0 %v425
    %808 = vmatprep.subr.mxu0 0.0
    %809 = vmatpush1.msra.mxu0 %v428
    %810 = vmatprep.subr.mxu0 0.0
    %811 = vmatpush1.msra.mxu0 %v431
    %812 = vmatprep.subr.mxu0 0.0
    %813 = vmatpush1.msra.mxu0 %v434
    %814 = vmatprep.subr.mxu0 0.0
    %815 = vmatpush1.msra.mxu0 %v437
    %816 = vmatprep.subr.mxu0 0.0
    %817 = vmatpush1.msra.mxu0 0.0
    %818 = vmatprep.subr.mxu0 0.0
    %819 = vmatpush1.msra.mxu0 0.0
    %820 = vmatprep.subr.mxu0 0.0
    %821 = vmatpush1.msra.mxu0 0.0
    %822 = vmatprep.subr.mxu0 0.0
    %823 = vmatpush1.msra.mxu0 0.0
    %824 = vmatprep.subr.mxu0 0.0
    %825 = vmatpush1.msra.mxu0 0.0
    %826 = vmatprep.subr.mxu0 0.0
    %827 = vmatpush1.msra.mxu0 0.0
    %828 = vmatprep.subr.mxu0 0.0
    %829 = vmatpush1.msra.mxu0 0.0
    %830 = vmatprep.subr.mxu0 0.0
    %831 = vmatpush1.msra.mxu0 0.0
    %832 = vmatprep.subr.mxu0 0.0
    %833 = vmatpush1.msra.mxu0 0.0
    %834 = vmatprep.subr.mxu0 0.0
    %835 = vmatpush1.msra.mxu0 0.0
    %836 = vmatprep.subr.mxu0 0.0
    %837 = vmatpush1.msra.mxu0 0.0
    %838 = vmatprep.subr.mxu0 0.0
    %839 = vmatpush1.msra.mxu0 0.0
    %840 = vmatprep.subr.mxu0 0.0
    %841 = vmatpush1.msra.mxu0 0.0
    %842 = vmatprep.subr.mxu0 0.0
    %843 = vmatpush1.msra.mxu0 0.0
    %844 = vmatprep.subr.mxu0 0.0
    %845 = vmatpush1.msra.mxu0 0.0
    %846 = vmatprep.subr.mxu0 0.0
    %847 = vmatpush1.msra.mxu0 0.0
    %848 = vmatprep.mubr.f32.mxu0 0.0
    %849 = vmatmul.mubr.f32.gmra.mrb[0].mxu0 %v617
    %v850 = vpop.f32.mrb[0].mxu0
    %v851 = vadd.f32 %v451, %v850
    %v852 = vpop.f32.mrb[0].mxu0
    %853 = vdwg.mxu0
    %v854 = vadd.f32 %v245, %v780
    %v855 = vxor.u32 %v854, 2147483648
    %v856 = vmul.f32 %v855, 1.442695
    %v857 = vpow.pop %v856
    %v858 = vadd.f32 %v857, 1.0
    %v859 = vrcp.pop %v858
    %v860 = vmul.f32 1.0, %v859
    %v861 = vadd.f32 %v247, %v782
    %v862 = vxor.u32 %v861, 2147483648
    %v863 = vmul.f32 %v862, 1.442695
    %v864 = vpow.pop %v863
    %v865 = vadd.f32 %v864, 1.0
    %v866 = vrcp.pop %v865
    %v867 = vmul.f32 1.0, %v866
    %v868 = vmul.f32 %v860, %v851
    %v869 = vadd.f32 %v357, %v868
    %v870 = vtanh.pop %v869
    %v871 = vsub.f32 1.0, %v867
    %v872 = vmul.f32 %v871, %v870
    %v873 = vmul.f32 %v867, %v617
    %v874 = vadd.f32 %v872, %v873
    %875 = vmatprep.subr.mxu0 %v391
    %876 = vmatpush1.msra.mxu0 %v390
    %877 = vmatprep.subr.mxu0 %v394
    %878 = vmatpush1.msra.mxu0 %v393
    %879 = vmatprep.subr.mxu0 %v397
    %880 = vmatpush1.msra.mxu0 %v396
    %881 = vmatprep.subr.mxu0 %v400
    %882 = vmatpush1.msra.mxu0 %v399
    %883 = vmatprep.subr.mxu0 %v403
    %884 = vmatpush1.msra.mxu0 %v402
    %885 = vmatprep.subr.mxu0 %v406
    %886 = vmatpush1.msra.mxu0 %v405
    %887 = vmatprep.subr.mxu0 %v409
    %888 = vmatpush1.msra.mxu0 %v408
    %889 = vmatprep.subr.mxu0 %v412
    %890 = vmatpush1.msra.mxu0 %v411
    %891 = vmatprep.subr.mxu0 %v415
    %892 = vmatpush1.msra.mxu0 %v414
    %893 = vmatprep.subr.mxu0 %v418
    %894 = vmatpush1.msra.mxu0 %v417
    %895 = vmatprep.subr.mxu0 %v421
    %896 = vmatpush1.msra.mxu0 %v420
    %897 = vmatprep.subr.mxu0 %v424
    %898 = vmatpush1.msra.mxu0 %v423
    %899 = vmatprep.subr.mxu0 %v427
    %900 = vmatpush1.msra.mxu0 %v426
    %901 = vmatprep.subr.mxu0 %v430
    %902 = vmatpush1.msra.mxu0 %v429
    %903 = vmatprep.subr.mxu0 %v433
    %904 = vmatpush1.msra.mxu0 %v432
    %905 = vmatprep.subr.mxu0 %v436
    %906 = vmatpush1.msra.mxu0 %v435
    %907 = vmatprep.subr.mxu0 0.0
    %908 = vmatpush1.msra.mxu0 0.0
    %909 = vmatprep.subr.mxu0 0.0
    %910 = vmatpush1.msra.mxu0 0.0
    %911 = vmatprep.subr.mxu0 0.0
    %912 = vmatpush1.msra.mxu0 0.0
    %913 = vmatprep.subr.mxu0 0.0
    %914 = vmatpush1.msra.mxu0 0.0
    %915 = vmatprep.subr.mxu0 0.0
    %916 = vmatpush1.msra.mxu0 0.0
    %917 = vmatprep.subr.mxu0 0.0
    %918 = vmatpush1.msra.mxu0 0.0
    %919 = vmatprep.subr.mxu0 0.0
    %920 = vmatpush1.msra.mxu0 0.0
    %921 = vmatprep.subr.mxu0 0.0
    %922 = vmatpush1.msra.mxu0 0.0
    %923 = vmatprep.subr.mxu0 0.0
    %924 = vmatpush1.msra.mxu0 0.0
    %925 = vmatprep.subr.mxu0 0.0
    %926 = vmatpush1.msra.mxu0 0.0
    %927 = vmatprep.subr.mxu0 0.0
    %928 = vmatpush1.msra.mxu0 0.0
    %929 = vmatprep.subr.mxu0 0.0
    %930 = vmatpush1.msra.mxu0 0.0
    %931 = vmatprep.subr.mxu0 0.0
    %932 = vmatpush1.msra.mxu0 0.0
    %933 = vmatprep.subr.mxu0 0.0
    %934 = vmatpush1.msra.mxu0 0.0
    %935 = vmatprep.subr.mxu0 0.0
    %936 = vmatpush1.msra.mxu0 0.0
    %937 = vmatprep.subr.mxu0 0.0
    %938 = vmatpush1.msra.mxu0 0.0
    %939 = vmatprep.mubr.f32.mxu0 0.0
    %940 = vmatmul.mubr.f32.gmra.mrb[0].mxu0 %v874
    %v941 = vpop.f32.mrb[0].mxu0
    %v942 = vadd.f32 %v443, %v941
    %v943 = vpop.f32.mrb[0].mxu0
    %v944 = vadd.f32 %v447, %v943
    %945 = vdwg.mxu0
    %946 = vmatprep.subr.mxu0 0.0
    %947 = vmatpush1.msra.mxu0 %v392
    %948 = vmatprep.subr.mxu0 0.0
    %949 = vmatpush1.msra.mxu0 %v395
    %950 = vmatprep.subr.mxu0 0.0
    %951 = vmatpush1.msra.mxu0 %v398
    %952 = vmatprep.subr.mxu0 0.0
    %953 = vmatpush1.msra.mxu0 %v401
    %954 = vmatprep.subr.mxu0 0.0
    %955 = vmatpush1.msra.mxu0 %v404
    %956 = vmatprep.subr.mxu0 0.0
    %957 = vmatpush1.msra.mxu0 %v407
    %958 = vmatprep.subr.mxu0 0.0
    %959 = vmatpush1.msra.mxu0 %v410
    %960 = vmatprep.subr.mxu0 0.0
    %961 = vmatpush1.msra.mxu0 %v413
    %962 = vmatprep.subr.mxu0 0.0
    %963 = vmatpush1.msra.mxu0 %v416
    %964 = vmatprep.subr.mxu0 0.0
    %965 = vmatpush1.msra.mxu0 %v419
    %966 = vmatprep.subr.mxu0 0.0
    %967 = vmatpush1.msra.mxu0 %v422
    %968 = vmatprep.subr.mxu0 0.0
    %969 = vmatpush1.msra.mxu0 %v425
    %970 = vmatprep.subr.mxu0 0.0
    %971 = vmatpush1.msra.mxu0 %v428
    %972 = vmatprep.subr.mxu0 0.0
    %973 = vmatpush1.msra.mxu0 %v431
    %974 = vmatprep.subr.mxu0 0.0
    %975 = vmatpush1.msra.mxu0 %v434
    %976 = vmatprep.subr.mxu0 0.0
    %977 = vmatpush1.msra.mxu0 %v437
    %978 = vmatprep.subr.mxu0 0.0
    %979 = vmatpush1.msra.mxu0 0.0
    %980 = vmatprep.subr.mxu0 0.0
    %981 = vmatpush1.msra.mxu0 0.0
    %982 = vmatprep.subr.mxu0 0.0
    %983 = vmatpush1.msra.mxu0 0.0
    %984 = vmatprep.subr.mxu0 0.0
    %985 = vmatpush1.msra.mxu0 0.0
    %986 = vmatprep.subr.mxu0 0.0
    %987 = vmatpush1.msra.mxu0 0.0
    %988 = vmatprep.subr.mxu0 0.0
    %989 = vmatpush1.msra.mxu0 0.0
    %990 = vmatprep.subr.mxu0 0.0
    %991 = vmatpush1.msra.mxu0 0.0
    %992 = vmatprep.subr.mxu0 0.0
    %993 = vmatpush1.msra.mxu0 0.0
    %994 = vmatprep.subr.mxu0 0.0
    %995 = vmatpush1.msra.mxu0 0.0
    %996 = vmatprep.subr.mxu0 0.0
    %997 = vmatpush1.msra.mxu0 0.0
    %998 = vmatprep.subr.mxu0 0.0
    %999 = vmatpush1.msra.mxu0 0.0
    %1000 = vmatprep.subr.mxu0 0.0
    %1001 = vmatpush1.msra.mxu0 0.0
    %1002 = vmatprep.subr.mxu0 0.0
    %1003 = vmatpush1.msra.mxu0 0.0
    %1004 = vmatprep.subr.mxu0 0.0
    %1005 = vmatpush1.msra.mxu0 0.0
    %1006 = vmatprep.subr.mxu0 0.0
    %1007 = vmatpush1.msra.mxu0 0.0
    %1008 = vmatprep.subr.mxu0 0.0
    %1009 = vmatpush1.msra.mxu0 0.0
    %1010 = vmatprep.mubr.f32.mxu0 0.0
    %1011 = vmatmul.mubr.f32.gmra.mrb[0].mxu0 %v874
    %v1012 = vpop.f32.mrb[0].mxu0
    %v1013 = vadd.f32 %v451, %v1012
    %v1014 = vpop.f32.mrb[0].mxu0
    %1015 = vdwg.mxu0
    %v1016 = vadd.f32 %v251, %v942
    %v1017 = vxor.u32 %v1016, 2147483648
    %v1018 = vmul.f32 %v1017, 1.442695
    %v1019 = vpow.pop %v1018
    %v1020 = vadd.f32 %v1019, 1.0
    %v1021 = vrcp.pop %v1020
    %v1022 = vmul.f32 1.0, %v1021
    %v1023 = vadd.f32 %v253, %v944
    %v1024 = vxor.u32 %v1023, 2147483648
    %v1025 = vmul.f32 %v1024, 1.442695
    %v1026 = vpow.pop %v1025
    %v1027 = vadd.f32 %v1026, 1.0
    %v1028 = vrcp.pop %v1027
    %v1029 = vmul.f32 1.0, %v1028
    %v1030 = vmul.f32 %v1022, %v1013
    %v1031 = vadd.f32 %v362, %v1030
    %v1032 = vtanh.pop %v1031
    %v1033 = vsub.f32 1.0, %v1029
    %v1034 = vmul.f32 %v1033, %v1032
    %v1035 = vmul.f32 %v1029, %v874
    %v1036 = vadd.f32 %v1034, %v1035
    %1037 = vmatprep.subr.mxu0 %v391
    %1038 = vmatpush1.msra.mxu0 %v390
    %1039 = vmatprep.subr.mxu0 %v394
    %1040 = vmatpush1.msra.mxu0 %v393
    %1041 = vmatprep.subr.mxu0 %v397
    %1042 = vmatpush1.msra.mxu0 %v396
    %1043 = vmatprep.subr.mxu0 %v400
    %1044 = vmatpush1.msra.mxu0 %v399
    %1045 = vmatprep.subr.mxu0 %v403
    %1046 = vmatpush1.msra.mxu0 %v402
    %1047 = vmatprep.subr.mxu0 %v406
    %1048 = vmatpush1.msra.mxu0 %v405
    %1049 = vmatprep.subr.mxu0 %v409
    %1050 = vmatpush1.msra.mxu0 %v408
    %1051 = vmatprep.subr.mxu0 %v412
    %1052 = vmatpush1.msra.mxu0 %v411
    %1053 = vmatprep.subr.mxu0 %v415
    %1054 = vmatpush1.msra.mxu0 %v414
    %1055 = vmatprep.subr.mxu0 %v418
    %1056 = vmatpush1.msra.mxu0 %v417
    %1057 = vmatprep.subr.mxu0 %v421
    %1058 = vmatpush1.msra.mxu0 %v420
    %1059 = vmatprep.subr.mxu0 %v424
    %1060 = vmatpush1.msra.mxu0 %v423
    %1061 = vmatprep.subr.mxu0 %v427
    %1062 = vmatpush1.msra.mxu0 %v426
    %1063 = vmatprep.subr.mxu0 %v430
    %1064 = vmatpush1.msra.mxu0 %v429
    %1065 = vmatprep.subr.mxu0 %v433
    %1066 = vmatpush1.msra.mxu0 %v432
    %1067 = vmatprep.subr.mxu0 %v436
    %1068 = vmatpush1.msra.mxu0 %v435
    %1069 = vmatprep.subr.mxu0 0.0
    %1070 = vmatpush1.msra.mxu0 0.0
    %1071 = vmatprep.subr.mxu0 0.0
    %1072 = vmatpush1.msra.mxu0 0.0
    %1073 = vmatprep.subr.mxu0 0.0
    %1074 = vmatpush1.msra.mxu0 0.0
    %1075 = vmatprep.subr.mxu0 0.0
    %1076 = vmatpush1.msra.mxu0 0.0
    %1077 = vmatprep.subr.mxu0 0.0
    %1078 = vmatpush1.msra.mxu0 0.0
    %1079 = vmatprep.subr.mxu0 0.0
    %1080 = vmatpush1.msra.mxu0 0.0
    %1081 = vmatprep.subr.mxu0 0.0
    %1082 = vmatpush1.msra.mxu0 0.0
    %1083 = vmatprep.subr.mxu0 0.0
    %1084 = vmatpush1.msra.mxu0 0.0
    %1085 = vmatprep.subr.mxu0 0.0
    %1086 = vmatpush1.msra.mxu0 0.0
    %1087 = vmatprep.subr.mxu0 0.0
    %1088 = vmatpush1.msra.mxu0 0.0
    %1089 = vmatprep.subr.mxu0 0.0
    %1090 = vmatpush1.msra.mxu0 0.0
    %1091 = vmatprep.subr.mxu0 0.0
    %1092 = vmatpush1.msra.mxu0 0.0
    %1093 = vmatprep.subr.mxu0 0.0
    %1094 = vmatpush1.msra.mxu0 0.0
    %1095 = vmatprep.subr.mxu0 0.0
    %1096 = vmatpush1.msra.mxu0 0.0
    %1097 = vmatprep.subr.mxu0 0.0
    %1098 = vmatpush1.msra.mxu0 0.0
    %1099 = vmatprep.subr.mxu0 0.0
    %1100 = vmatpush1.msra.mxu0 0.0
    %1101 = vmatprep.mubr.f32.mxu0 0.0
    %1102 = vmatmul.mubr.f32.gmra.mrb[0].mxu0 %v1036
    %v1103 = vpop.f32.mrb[0].mxu0
    %v1104 = vadd.f32 %v443, %v1103
    %v1105 = vpop.f32.mrb[0].mxu0
    %v1106 = vadd.f32 %v447, %v1105
    %1107 = vdwg.mxu0
    %1108 = vmatprep.subr.mxu0 0.0
    %1109 = vmatpush1.msra.mxu0 %v392
    %1110 = vmatprep.subr.mxu0 0.0
    %1111 = vmatpush1.msra.mxu0 %v395
    %1112 = vmatprep.subr.mxu0 0.0
    %1113 = vmatpush1.msra.mxu0 %v398
    %1114 = vmatprep.subr.mxu0 0.0
    %1115 = vmatpush1.msra.mxu0 %v401
    %1116 = vmatprep.subr.mxu0 0.0
    %1117 = vmatpush1.msra.mxu0 %v404
    %1118 = vmatprep.subr.mxu0 0.0
    %1119 = vmatpush1.msra.mxu0 %v407
    %1120 = vmatprep.subr.mxu0 0.0
    %1121 = vmatpush1.msra.mxu0 %v410
    %1122 = vmatprep.subr.mxu0 0.0
    %1123 = vmatpush1.msra.mxu0 %v413
    %1124 = vmatprep.subr.mxu0 0.0
    %1125 = vmatpush1.msra.mxu0 %v416
    %1126 = vmatprep.subr.mxu0 0.0
    %1127 = vmatpush1.msra.mxu0 %v419
    %1128 = vmatprep.subr.mxu0 0.0
    %1129 = vmatpush1.msra.mxu0 %v422
    %1130 = vmatprep.subr.mxu0 0.0
    %1131 = vmatpush1.msra.mxu0 %v425
    %1132 = vmatprep.subr.mxu0 0.0
    %1133 = vmatpush1.msra.mxu0 %v428
    %1134 = vmatprep.subr.mxu0 0.0
    %1135 = vmatpush1.msra.mxu0 %v431
    %1136 = vmatprep.subr.mxu0 0.0
    %1137 = vmatpush1.msra.mxu0 %v434
    %1138 = vmatprep.subr.mxu0 0.0
    %1139 = vmatpush1.msra.mxu0 %v437
    %1140 = vmatprep.subr.mxu0 0.0
    %1141 = vmatpush1.msra.mxu0 0.0
    %1142 = vmatprep.subr.mxu0 0.0
    %1143 = vmatpush1.msra.mxu0 0.0
    %1144 = vmatprep.subr.mxu0 0.0
    %1145 = vmatpush1.msra.mxu0 0.0
    %1146 = vmatprep.subr.mxu0 0.0
    %1147 = vmatpush1.msra.mxu0 0.0
    %1148 = vmatprep.subr.mxu0 0.0
    %1149 = vmatpush1.msra.mxu0 0.0
    %1150 = vmatprep.subr.mxu0 0.0
    %1151 = vmatpush1.msra.mxu0 0.0
    %1152 = vmatprep.subr.mxu0 0.0
    %1153 = vmatpush1.msra.mxu0 0.0
    %1154 = vmatprep.subr.mxu0 0.0
    %1155 = vmatpush1.msra.mxu0 0.0
    %1156 = vmatprep.subr.mxu0 0.0
    %1157 = vmatpush1.msra.mxu0 0.0
    %1158 = vmatprep.subr.mxu0 0.0
    %1159 = vmatpush1.msra.mxu0 0.0
    %1160 = vmatprep.subr.mxu0 0.0
    %1161 = vmatpush1.msra.mxu0 0.0
    %1162 = vmatprep.subr.mxu0 0.0
    %1163 = vmatpush1.msra.mxu0 0.0
    %1164 = vmatprep.subr.mxu0 0.0
    %1165 = vmatpush1.msra.mxu0 0.0
    %1166 = vmatprep.subr.mxu0 0.0
    %1167 = vmatpush1.msra.mxu0 0.0
    %1168 = vmatprep.subr.mxu0 0.0
    %1169 = vmatpush1.msra.mxu0 0.0
    %1170 = vmatprep.subr.mxu0 0.0
    %1171 = vmatpush1.msra.mxu0 0.0
    %1172 = vmatprep.mubr.f32.mxu0 0.0
    %1173 = vmatmul.mubr.f32.gmra.mrb[0].mxu0 %v1036
    %v1174 = vpop.f32.mrb[0].mxu0
    %v1175 = vadd.f32 %v451, %v1174
    %v1176 = vpop.f32.mrb[0].mxu0
    %1177 = vdwg.mxu0
    %v1178 = vadd.f32 %v257, %v1104
    %v1179 = vxor.u32 %v1178, 2147483648
    %v1180 = vmul.f32 %v1179, 1.442695
    %v1181 = vpow.pop %v1180
    %v1182 = vadd.f32 %v1181, 1.0
    %v1183 = vrcp.pop %v1182
    %v1184 = vmul.f32 1.0, %v1183
    %v1185 = vadd.f32 %v259, %v1106
    %v1186 = vxor.u32 %v1185, 2147483648
    %v1187 = vmul.f32 %v1186, 1.442695
    %v1188 = vpow.pop %v1187
    %v1189 = vadd.f32 %v1188, 1.0
    %v1190 = vrcp.pop %v1189
    %v1191 = vmul.f32 1.0, %v1190
    %v1192 = vmul.f32 %v1184, %v1175
    %v1193 = vadd.f32 %v367, %v1192
    %v1194 = vtanh.pop %v1193
    %v1195 = vsub.f32 1.0, %v1191
    %v1196 = vmul.f32 %v1195, %v1194
    %v1197 = vmul.f32 %v1191, %v1036
    %v1198 = vadd.f32 %v1196, %v1197
    %1199 = vmatprep.subr.mxu0 %v391
    %1200 = vmatpush1.msra.mxu0 %v390
    %1201 = vmatprep.subr.mxu0 %v394
    %1202 = vmatpush1.msra.mxu0 %v393
    %1203 = vmatprep.subr.mxu0 %v397
    %1204 = vmatpush1.msra.mxu0 %v396
    %1205 = vmatprep.subr.mxu0 %v400
    %1206 = vmatpush1.msra.mxu0 %v399
    %1207 = vmatprep.subr.mxu0 %v403
    %1208 = vmatpush1.msra.mxu0 %v402
    %1209 = vmatprep.subr.mxu0 %v406
    %1210 = vmatpush1.msra.mxu0 %v405
    %1211 = vmatprep.subr.mxu0 %v409
    %1212 = vmatpush1.msra.mxu0 %v408
    %1213 = vmatprep.subr.mxu0 %v412
    %1214 = vmatpush1.msra.mxu0 %v411
    %1215 = vmatprep.subr.mxu0 %v415
    %1216 = vmatpush1.msra.mxu0 %v414
    %1217 = vmatprep.subr.mxu0 %v418
    %1218 = vmatpush1.msra.mxu0 %v417
    %1219 = vmatprep.subr.mxu0 %v421
    %1220 = vmatpush1.msra.mxu0 %v420
    %1221 = vmatprep.subr.mxu0 %v424
    %1222 = vmatpush1.msra.mxu0 %v423
    %1223 = vmatprep.subr.mxu0 %v427
    %1224 = vmatpush1.msra.mxu0 %v426
    %1225 = vmatprep.subr.mxu0 %v430
    %1226 = vmatpush1.msra.mxu0 %v429
    %1227 = vmatprep.subr.mxu0 %v433
    %1228 = vmatpush1.msra.mxu0 %v432
    %1229 = vmatprep.subr.mxu0 %v436
    %1230 = vmatpush1.msra.mxu0 %v435
    %1231 = vmatprep.subr.mxu0 0.0
    %1232 = vmatpush1.msra.mxu0 0.0
    %1233 = vmatprep.subr.mxu0 0.0
    %1234 = vmatpush1.msra.mxu0 0.0
    %1235 = vmatprep.subr.mxu0 0.0
    %1236 = vmatpush1.msra.mxu0 0.0
    %1237 = vmatprep.subr.mxu0 0.0
    %1238 = vmatpush1.msra.mxu0 0.0
    %1239 = vmatprep.subr.mxu0 0.0
    %1240 = vmatpush1.msra.mxu0 0.0
    %1241 = vmatprep.subr.mxu0 0.0
    %1242 = vmatpush1.msra.mxu0 0.0
    %1243 = vmatprep.subr.mxu0 0.0
    %1244 = vmatpush1.msra.mxu0 0.0
    %1245 = vmatprep.subr.mxu0 0.0
    %1246 = vmatpush1.msra.mxu0 0.0
    %1247 = vmatprep.subr.mxu0 0.0
    %1248 = vmatpush1.msra.mxu0 0.0
    %1249 = vmatprep.subr.mxu0 0.0
    %1250 = vmatpush1.msra.mxu0 0.0
    %1251 = vmatprep.subr.mxu0 0.0
    %1252 = vmatpush1.msra.mxu0 0.0
    %1253 = vmatprep.subr.mxu0 0.0
    %1254 = vmatpush1.msra.mxu0 0.0
    %1255 = vmatprep.subr.mxu0 0.0
    %1256 = vmatpush1.msra.mxu0 0.0
    %1257 = vmatprep.subr.mxu0 0.0
    %1258 = vmatpush1.msra.mxu0 0.0
    %1259 = vmatprep.subr.mxu0 0.0
    %1260 = vmatpush1.msra.mxu0 0.0
    %1261 = vmatprep.subr.mxu0 0.0
    %1262 = vmatpush1.msra.mxu0 0.0
    %1263 = vmatprep.mubr.f32.mxu0 0.0
    %1264 = vmatmul.mubr.f32.gmra.mrb[0].mxu0 %v1198
    %v1265 = vpop.f32.mrb[0].mxu0
    %v1266 = vadd.f32 %v443, %v1265
    %v1267 = vpop.f32.mrb[0].mxu0
    %v1268 = vadd.f32 %v447, %v1267
    %1269 = vdwg.mxu0
    %1270 = vmatprep.subr.mxu0 0.0
    %1271 = vmatpush1.msra.mxu0 %v392
    %1272 = vmatprep.subr.mxu0 0.0
    %1273 = vmatpush1.msra.mxu0 %v395
    %1274 = vmatprep.subr.mxu0 0.0
    %1275 = vmatpush1.msra.mxu0 %v398
    %1276 = vmatprep.subr.mxu0 0.0
    %1277 = vmatpush1.msra.mxu0 %v401
    %1278 = vmatprep.subr.mxu0 0.0
    %1279 = vmatpush1.msra.mxu0 %v404
    %1280 = vmatprep.subr.mxu0 0.0
    %1281 = vmatpush1.msra.mxu0 %v407
    %1282 = vmatprep.subr.mxu0 0.0
    %1283 = vmatpush1.msra.mxu0 %v410
    %1284 = vmatprep.subr.mxu0 0.0
    %1285 = vmatpush1.msra.mxu0 %v413
    %1286 = vmatprep.subr.mxu0 0.0
    %1287 = vmatpush1.msra.mxu0 %v416
    %1288 = vmatprep.subr.mxu0 0.0
    %1289 = vmatpush1.msra.mxu0 %v419
    %1290 = vmatprep.subr.mxu0 0.0
    %1291 = vmatpush1.msra.mxu0 %v422
    %1292 = vmatprep.subr.mxu0 0.0
    %1293 = vmatpush1.msra.mxu0 %v425
    %1294 = vmatprep.subr.mxu0 0.0
    %1295 = vmatpush1.msra.mxu0 %v428
    %1296 = vmatprep.subr.mxu0 0.0
    %1297 = vmatpush1.msra.mxu0 %v431
    %1298 = vmatprep.subr.mxu0 0.0
    %1299 = vmatpush1.msra.mxu0 %v434
    %1300 = vmatprep.subr.mxu0 0.0
    %1301 = vmatpush1.msra.mxu0 %v437
    %1302 = vmatprep.subr.mxu0 0.0
    %1303 = vmatpush1.msra.mxu0 0.0
    %1304 = vmatprep.subr.mxu0 0.0
    %1305 = vmatpush1.msra.mxu0 0.0
    %1306 = vmatprep.subr.mxu0 0.0
    %1307 = vmatpush1.msra.mxu0 0.0
    %1308 = vmatprep.subr.mxu0 0.0
    %1309 = vmatpush1.msra.mxu0 0.0
    %1310 = vmatprep.subr.mxu0 0.0
    %1311 = vmatpush1.msra.mxu0 0.0
    %1312 = vmatprep.subr.mxu0 0.0
    %1313 = vmatpush1.msra.mxu0 0.0
    %1314 = vmatprep.subr.mxu0 0.0
    %1315 = vmatpush1.msra.mxu0 0.0
    %1316 = vmatprep.subr.mxu0 0.0
    %1317 = vmatpush1.msra.mxu0 0.0
    %1318 = vmatprep.subr.mxu0 0.0
    %1319 = vmatpush1.msra.mxu0 0.0
    %1320 = vmatprep.subr.mxu0 0.0
    %1321 = vmatpush1.msra.mxu0 0.0
    %1322 = vmatprep.subr.mxu0 0.0
    %1323 = vmatpush1.msra.mxu0 0.0
    %1324 = vmatprep.subr.mxu0 0.0
    %1325 = vmatpush1.msra.mxu0 0.0
    %1326 = vmatprep.subr.mxu0 0.0
    %1327 = vmatpush1.msra.mxu0 0.0
    %1328 = vmatprep.subr.mxu0 0.0
    %1329 = vmatpush1.msra.mxu0 0.0
    %1330 = vmatprep.subr.mxu0 0.0
    %1331 = vmatpush1.msra.mxu0 0.0
    %1332 = vmatprep.subr.mxu0 0.0
    %1333 = vmatpush1.msra.mxu0 0.0
    %1334 = vmatprep.mubr.f32.mxu0 0.0
    %1335 = vmatmul.mubr.f32.gmra.mrb[0].mxu0 %v1198
    %v1336 = vpop.f32.mrb[0].mxu0
    %v1337 = vadd.f32 %v451, %v1336
    %v1338 = vpop.f32.mrb[0].mxu0
    %1339 = vdwg.mxu0
    %v1340 = vadd.f32 %v263, %v1266
    %v1341 = vxor.u32 %v1340, 2147483648
    %v1342 = vmul.f32 %v1341, 1.442695
    %v1343 = vpow.pop %v1342
    %v1344 = vadd.f32 %v1343, 1.0
    %v1345 = vrcp.pop %v1344
    %v1346 = vmul.f32 1.0, %v1345
    %v1347 = vadd.f32 %v265, %v1268
    %v1348 = vxor.u32 %v1347, 2147483648
    %v1349 = vmul.f32 %v1348, 1.442695
    %v1350 = vpow.pop %v1349
    %v1351 = vadd.f32 %v1350, 1.0
    %v1352 = vrcp.pop %v1351
    %v1353 = vmul.f32 1.0, %v1352
    %v1354 = vmul.f32 %v1346, %v1337
    %v1355 = vadd.f32 %v372, %v1354
    %v1356 = vtanh.pop %v1355
    %v1357 = vsub.f32 1.0, %v1353
    %v1358 = vmul.f32 %v1357, %v1356
    %v1359 = vmul.f32 %v1353, %v1198
    %v1360 = vadd.f32 %v1358, %v1359
    %1361 = vmatprep.subr.mxu0 %v391
    %1362 = vmatpush1.msra.mxu0 %v390
    %1363 = vmatprep.subr.mxu0 %v394
    %1364 = vmatpush1.msra.mxu0 %v393
    %1365 = vmatprep.subr.mxu0 %v397
    %1366 = vmatpush1.msra.mxu0 %v396
    %1367 = vmatprep.subr.mxu0 %v400
    %1368 = vmatpush1.msra.mxu0 %v399
    %1369 = vmatprep.subr.mxu0 %v403
    %1370 = vmatpush1.msra.mxu0 %v402
    %1371 = vmatprep.subr.mxu0 %v406
    %1372 = vmatpush1.msra.mxu0 %v405
    %1373 = vmatprep.subr.mxu0 %v409
    %1374 = vmatpush1.msra.mxu0 %v408
    %1375 = vmatprep.subr.mxu0 %v412
    %1376 = vmatpush1.msra.mxu0 %v411
    %1377 = vmatprep.subr.mxu0 %v415
    %1378 = vmatpush1.msra.mxu0 %v414
    %1379 = vmatprep.subr.mxu0 %v418
    %1380 = vmatpush1.msra.mxu0 %v417
    %1381 = vmatprep.subr.mxu0 %v421
    %1382 = vmatpush1.msra.mxu0 %v420
    %1383 = vmatprep.subr.mxu0 %v424
    %1384 = vmatpush1.msra.mxu0 %v423
    %1385 = vmatprep.subr.mxu0 %v427
    %1386 = vmatpush1.msra.mxu0 %v426
    %1387 = vmatprep.subr.mxu0 %v430
    %1388 = vmatpush1.msra.mxu0 %v429
    %1389 = vmatprep.subr.mxu0 %v433
    %1390 = vmatpush1.msra.mxu0 %v432
    %1391 = vmatprep.subr.mxu0 %v436
    %1392 = vmatpush1.msra.mxu0 %v435
    %1393 = vmatprep.subr.mxu0 0.0
    %1394 = vmatpush1.msra.mxu0 0.0
    %1395 = vmatprep.subr.mxu0 0.0
    %1396 = vmatpush1.msra.mxu0 0.0
    %1397 = vmatprep.subr.mxu0 0.0
    %1398 = vmatpush1.msra.mxu0 0.0
    %1399 = vmatprep.subr.mxu0 0.0
    %1400 = vmatpush1.msra.mxu0 0.0
    %1401 = vmatprep.subr.mxu0 0.0
    %1402 = vmatpush1.msra.mxu0 0.0
    %1403 = vmatprep.subr.mxu0 0.0
    %1404 = vmatpush1.msra.mxu0 0.0
    %1405 = vmatprep.subr.mxu0 0.0
    %1406 = vmatpush1.msra.mxu0 0.0
    %1407 = vmatprep.subr.mxu0 0.0
    %1408 = vmatpush1.msra.mxu0 0.0
    %1409 = vmatprep.subr.mxu0 0.0
    %1410 = vmatpush1.msra.mxu0 0.0
    %1411 = vmatprep.subr.mxu0 0.0
    %1412 = vmatpush1.msra.mxu0 0.0
    %1413 = vmatprep.subr.mxu0 0.0
    %1414 = vmatpush1.msra.mxu0 0.0
    %1415 = vmatprep.subr.mxu0 0.0
    %1416 = vmatpush1.msra.mxu0 0.0
    %1417 = vmatprep.subr.mxu0 0.0
    %1418 = vmatpush1.msra.mxu0 0.0
    %1419 = vmatprep.subr.mxu0 0.0
    %1420 = vmatpush1.msra.mxu0 0.0
    %1421 = vmatprep.subr.mxu0 0.0
    %1422 = vmatpush1.msra.mxu0 0.0
    %1423 = vmatprep.subr.mxu0 0.0
    %1424 = vmatpush1.msra.mxu0 0.0
    %1425 = vmatprep.mubr.f32.mxu0 0.0
    %1426 = vmatmul.mubr.f32.gmra.mrb[0].mxu0 %v1360
    %v1427 = vpop.f32.mrb[0].mxu0
    %v1428 = vadd.f32 %v443, %v1427
    %v1429 = vpop.f32.mrb[0].mxu0
    %v1430 = vadd.f32 %v447, %v1429
    %1431 = vdwg.mxu0
    %1432 = vmatprep.subr.mxu0 0.0
    %1433 = vmatpush1.msra.mxu0 %v392
    %1434 = vmatprep.subr.mxu0 0.0
    %1435 = vmatpush1.msra.mxu0 %v395
    %1436 = vmatprep.subr.mxu0 0.0
    %1437 = vmatpush1.msra.mxu0 %v398
    %1438 = vmatprep.subr.mxu0 0.0
    %1439 = vmatpush1.msra.mxu0 %v401
    %1440 = vmatprep.subr.mxu0 0.0
    %1441 = vmatpush1.msra.mxu0 %v404
    %1442 = vmatprep.subr.mxu0 0.0
    %1443 = vmatpush1.msra.mxu0 %v407
    %1444 = vmatprep.subr.mxu0 0.0
    %1445 = vmatpush1.msra.mxu0 %v410
    %1446 = vmatprep.subr.mxu0 0.0
    %1447 = vmatpush1.msra.mxu0 %v413
    %1448 = vmatprep.subr.mxu0 0.0
    %1449 = vmatpush1.msra.mxu0 %v416
    %1450 = vmatprep.subr.mxu0 0.0
    %1451 = vmatpush1.msra.mxu0 %v419
    %1452 = vmatprep.subr.mxu0 0.0
    %1453 = vmatpush1.msra.mxu0 %v422
    %1454 = vmatprep.subr.mxu0 0.0
    %1455 = vmatpush1.msra.mxu0 %v425
    %1456 = vmatprep.subr.mxu0 0.0
    %1457 = vmatpush1.msra.mxu0 %v428
    %1458 = vmatprep.subr.mxu0 0.0
    %1459 = vmatpush1.msra.mxu0 %v431
    %1460 = vmatprep.subr.mxu0 0.0
    %1461 = vmatpush1.msra.mxu0 %v434
    %1462 = vmatprep.subr.mxu0 0.0
    %1463 = vmatpush1.msra.mxu0 %v437
    %1464 = vmatprep.subr.mxu0 0.0
    %1465 = vmatpush1.msra.mxu0 0.0
    %1466 = vmatprep.subr.mxu0 0.0
    %1467 = vmatpush1.msra.mxu0 0.0
    %1468 = vmatprep.subr.mxu0 0.0
    %1469 = vmatpush1.msra.mxu0 0.0
    %1470 = vmatprep.subr.mxu0 0.0
    %1471 = vmatpush1.msra.mxu0 0.0
    %1472 = vmatprep.subr.mxu0 0.0
    %1473 = vmatpush1.msra.mxu0 0.0
    %1474 = vmatprep.subr.mxu0 0.0
    %1475 = vmatpush1.msra.mxu0 0.0
    %1476 = vmatprep.subr.mxu0 0.0
    %1477 = vmatpush1.msra.mxu0 0.0
    %1478 = vmatprep.subr.mxu0 0.0
    %1479 = vmatpush1.msra.mxu0 0.0
    %1480 = vmatprep.subr.mxu0 0.0
    %1481 = vmatpush1.msra.mxu0 0.0
    %1482 = vmatprep.subr.mxu0 0.0
    %1483 = vmatpush1.msra.mxu0 0.0
    %1484 = vmatprep.subr.mxu0 0.0
    %1485 = vmatpush1.msra.mxu0 0.0
    %1486 = vmatprep.subr.mxu0 0.0
    %1487 = vmatpush1.msra.mxu0 0.0
    %1488 = vmatprep.subr.mxu0 0.0
    %1489 = vmatpush1.msra.mxu0 0.0
    %1490 = vmatprep.subr.mxu0 0.0
    %1491 = vmatpush1.msra.mxu0 0.0
    %1492 = vmatprep.subr.mxu0 0.0
    %1493 = vmatpush1.msra.mxu0 0.0
    %1494 = vmatprep.subr.mxu0 0.0
    %1495 = vmatpush1.msra.mxu0 0.0
    %1496 = vmatprep.mubr.f32.mxu0 0.0
    %1497 = vmatmul.mubr.f32.gmra.mrb[0].mxu0 %v1360
    %v1498 = vpop.f32.mrb[0].mxu0
    %v1499 = vadd.f32 %v451, %v1498
    %v1500 = vpop.f32.mrb[0].mxu0
    %1501 = vdwg.mxu0
    %v1502 = vadd.f32 %v269, %v1428
    %v1503 = vxor.u32 %v1502, 2147483648
    %v1504 = vmul.f32 %v1503, 1.442695
    %v1505 = vpow.pop %v1504
    %v1506 = vadd.f32 %v1505, 1.0
    %v1507 = vrcp.pop %v1506
    %v1508 = vmul.f32 1.0, %v1507
    %v1509 = vadd.f32 %v271, %v1430
    %v1510 = vxor.u32 %v1509, 2147483648
    %v1511 = vmul.f32 %v1510, 1.442695
    %v1512 = vpow.pop %v1511
    %v1513 = vadd.f32 %v1512, 1.0
    %v1514 = vrcp.pop %v1513
    %v1515 = vmul.f32 1.0, %v1514
    %v1516 = vmul.f32 %v1508, %v1499
    %v1517 = vadd.f32 %v377, %v1516
    %v1518 = vtanh.pop %v1517
    %v1519 = vsub.f32 1.0, %v1515
    %v1520 = vmul.f32 %v1519, %v1518
    %v1521 = vmul.f32 %v1515, %v1360
    %v1522 = vadd.f32 %v1520, %v1521
    %1523 = vmatprep.subr.mxu0 %v391
    %1524 = vmatpush1.msra.mxu0 %v390
    %1525 = vmatprep.subr.mxu0 %v394
    %1526 = vmatpush1.msra.mxu0 %v393
    %1527 = vmatprep.subr.mxu0 %v397
    %1528 = vmatpush1.msra.mxu0 %v396
    %1529 = vmatprep.subr.mxu0 %v400
    %1530 = vmatpush1.msra.mxu0 %v399
    %1531 = vmatprep.subr.mxu0 %v403
    %1532 = vmatpush1.msra.mxu0 %v402
    %1533 = vmatprep.subr.mxu0 %v406
    %1534 = vmatpush1.msra.mxu0 %v405
    %1535 = vmatprep.subr.mxu0 %v409
    %1536 = vmatpush1.msra.mxu0 %v408
    %1537 = vmatprep.subr.mxu0 %v412
    %1538 = vmatpush1.msra.mxu0 %v411
    %1539 = vmatprep.subr.mxu0 %v415
    %1540 = vmatpush1.msra.mxu0 %v414
    %1541 = vmatprep.subr.mxu0 %v418
    %1542 = vmatpush1.msra.mxu0 %v417
    %1543 = vmatprep.subr.mxu0 %v421
    %1544 = vmatpush1.msra.mxu0 %v420
    %1545 = vmatprep.subr.mxu0 %v424
    %1546 = vmatpush1.msra.mxu0 %v423
    %1547 = vmatprep.subr.mxu0 %v427
    %1548 = vmatpush1.msra.mxu0 %v426
    %1549 = vmatprep.subr.mxu0 %v430
    %1550 = vmatpush1.msra.mxu0 %v429
    %1551 = vmatprep.subr.mxu0 %v433
    %1552 = vmatpush1.msra.mxu0 %v432
    %1553 = vmatprep.subr.mxu0 %v436
    %1554 = vmatpush1.msra.mxu0 %v435
    %1555 = vmatprep.subr.mxu0 0.0
    %1556 = vmatpush1.msra.mxu0 0.0
    %1557 = vmatprep.subr.mxu0 0.0
    %1558 = vmatpush1.msra.mxu0 0.0
    %1559 = vmatprep.subr.mxu0 0.0
    %1560 = vmatpush1.msra.mxu0 0.0
    %1561 = vmatprep.subr.mxu0 0.0
    %1562 = vmatpush1.msra.mxu0 0.0
    %1563 = vmatprep.subr.mxu0 0.0
    %1564 = vmatpush1.msra.mxu0 0.0
    %1565 = vmatprep.subr.mxu0 0.0
    %1566 = vmatpush1.msra.mxu0 0.0
    %1567 = vmatprep.subr.mxu0 0.0
    %1568 = vmatpush1.msra.mxu0 0.0
    %1569 = vmatprep.subr.mxu0 0.0
    %1570 = vmatpush1.msra.mxu0 0.0
    %1571 = vmatprep.subr.mxu0 0.0
    %1572 = vmatpush1.msra.mxu0 0.0
    %1573 = vmatprep.subr.mxu0 0.0
    %1574 = vmatpush1.msra.mxu0 0.0
    %1575 = vmatprep.subr.mxu0 0.0
    %1576 = vmatpush1.msra.mxu0 0.0
    %1577 = vmatprep.subr.mxu0 0.0
    %1578 = vmatpush1.msra.mxu0 0.0
    %1579 = vmatprep.subr.mxu0 0.0
    %1580 = vmatpush1.msra.mxu0 0.0
    %1581 = vmatprep.subr.mxu0 0.0
    %1582 = vmatpush1.msra.mxu0 0.0
    %1583 = vmatprep.subr.mxu0 0.0
    %1584 = vmatpush1.msra.mxu0 0.0
    %1585 = vmatprep.subr.mxu0 0.0
    %1586 = vmatpush1.msra.mxu0 0.0
    %1587 = vmatprep.mubr.f32.mxu0 0.0
    %1588 = vmatmul.mubr.f32.gmra.mrb[0].mxu0 %v1522
    %v1589 = vpop.f32.mrb[0].mxu0
    %v1590 = vadd.f32 %v443, %v1589
    %v1591 = vpop.f32.mrb[0].mxu0
    %v1592 = vadd.f32 %v447, %v1591
    %1593 = vdwg.mxu0
    %1594 = vmatprep.subr.mxu0 0.0
    %1595 = vmatpush1.msra.mxu0 %v392
    %1596 = vmatprep.subr.mxu0 0.0
    %1597 = vmatpush1.msra.mxu0 %v395
    %1598 = vmatprep.subr.mxu0 0.0
    %1599 = vmatpush1.msra.mxu0 %v398
    %1600 = vmatprep.subr.mxu0 0.0
    %1601 = vmatpush1.msra.mxu0 %v401
    %1602 = vmatprep.subr.mxu0 0.0
    %1603 = vmatpush1.msra.mxu0 %v404
    %1604 = vmatprep.subr.mxu0 0.0
    %1605 = vmatpush1.msra.mxu0 %v407
    %1606 = vmatprep.subr.mxu0 0.0
    %1607 = vmatpush1.msra.mxu0 %v410
    %1608 = vmatprep.subr.mxu0 0.0
    %1609 = vmatpush1.msra.mxu0 %v413
    %1610 = vmatprep.subr.mxu0 0.0
    %1611 = vmatpush1.msra.mxu0 %v416
    %1612 = vmatprep.subr.mxu0 0.0
    %1613 = vmatpush1.msra.mxu0 %v419
    %1614 = vmatprep.subr.mxu0 0.0
    %1615 = vmatpush1.msra.mxu0 %v422
    %1616 = vmatprep.subr.mxu0 0.0
    %1617 = vmatpush1.msra.mxu0 %v425
    %1618 = vmatprep.subr.mxu0 0.0
    %1619 = vmatpush1.msra.mxu0 %v428
    %1620 = vmatprep.subr.mxu0 0.0
    %1621 = vmatpush1.msra.mxu0 %v431
    %1622 = vmatprep.subr.mxu0 0.0
    %1623 = vmatpush1.msra.mxu0 %v434
    %1624 = vmatprep.subr.mxu0 0.0
    %1625 = vmatpush1.msra.mxu0 %v437
    %1626 = vmatprep.subr.mxu0 0.0
    %1627 = vmatpush1.msra.mxu0 0.0
    %1628 = vmatprep.subr.mxu0 0.0
    %1629 = vmatpush1.msra.mxu0 0.0
    %1630 = vmatprep.subr.mxu0 0.0
    %1631 = vmatpush1.msra.mxu0 0.0
    %1632 = vmatprep.subr.mxu0 0.0
    %1633 = vmatpush1.msra.mxu0 0.0
    %1634 = vmatprep.subr.mxu0 0.0
    %1635 = vmatpush1.msra.mxu0 0.0
    %1636 = vmatprep.subr.mxu0 0.0
    %1637 = vmatpush1.msra.mxu0 0.0
    %1638 = vmatprep.subr.mxu0 0.0
    %1639 = vmatpush1.msra.mxu0 0.0
    %1640 = vmatprep.subr.mxu0 0.0
    %1641 = vmatpush1.msra.mxu0 0.0
    %1642 = vmatprep.subr.mxu0 0.0
    %1643 = vmatpush1.msra.mxu0 0.0
    %1644 = vmatprep.subr.mxu0 0.0
    %1645 = vmatpush1.msra.mxu0 0.0
    %1646 = vmatprep.subr.mxu0 0.0
    %1647 = vmatpush1.msra.mxu0 0.0
    %1648 = vmatprep.subr.mxu0 0.0
    %1649 = vmatpush1.msra.mxu0 0.0
    %1650 = vmatprep.subr.mxu0 0.0
    %1651 = vmatpush1.msra.mxu0 0.0
    %1652 = vmatprep.subr.mxu0 0.0
    %1653 = vmatpush1.msra.mxu0 0.0
    %1654 = vmatprep.subr.mxu0 0.0
    %1655 = vmatpush1.msra.mxu0 0.0
    %1656 = vmatprep.subr.mxu0 0.0
    %1657 = vmatpush1.msra.mxu0 0.0
    %1658 = vmatprep.mubr.f32.mxu0 0.0
    %1659 = vmatmul.mubr.f32.gmra.mrb[0].mxu0 %v1522
    %v1660 = vpop.f32.mrb[0].mxu0
    %v1661 = vadd.f32 %v451, %v1660
    %v1662 = vpop.f32.mrb[0].mxu0
    %1663 = vdwg.mxu0
    %v1664 = vadd.f32 %v275, %v1590
    %v1665 = vxor.u32 %v1664, 2147483648
    %v1666 = vmul.f32 %v1665, 1.442695
    %v1667 = vpow.pop %v1666
    %v1668 = vadd.f32 %v1667, 1.0
    %v1669 = vrcp.pop %v1668
    %v1670 = vmul.f32 1.0, %v1669
    %v1671 = vadd.f32 %v277, %v1592
    %v1672 = vxor.u32 %v1671, 2147483648
    %v1673 = vmul.f32 %v1672, 1.442695
    %v1674 = vpow.pop %v1673
    %v1675 = vadd.f32 %v1674, 1.0
    %v1676 = vrcp.pop %v1675
    %v1677 = vmul.f32 1.0, %v1676
    %v1678 = vmul.f32 %v1670, %v1661
    %v1679 = vadd.f32 %v382, %v1678
    %v1680 = vtanh.pop %v1679
    %v1681 = vsub.f32 1.0, %v1677
    %v1682 = vmul.f32 %v1681, %v1680
    %v1683 = vmul.f32 %v1677, %v1522
    %v1684 = vadd.f32 %v1682, %v1683
    %1685 = vmatprep.subr.mxu0 %v391
    %1686 = vmatpush1.msra.mxu0 %v390
    %1687 = vmatprep.subr.mxu0 %v394
    %1688 = vmatpush1.msra.mxu0 %v393
    %1689 = vmatprep.subr.mxu0 %v397
    %1690 = vmatpush1.msra.mxu0 %v396
    %1691 = vmatprep.subr.mxu0 %v400
    %1692 = vmatpush1.msra.mxu0 %v399
    %1693 = vmatprep.subr.mxu0 %v403
    %1694 = vmatpush1.msra.mxu0 %v402
    %1695 = vmatprep.subr.mxu0 %v406
    %1696 = vmatpush1.msra.mxu0 %v405
    %1697 = vmatprep.subr.mxu0 %v409
    %1698 = vmatpush1.msra.mxu0 %v408
    %1699 = vmatprep.subr.mxu0 %v412
    %1700 = vmatpush1.msra.mxu0 %v411
    %1701 = vmatprep.subr.mxu0 %v415
    %1702 = vmatpush1.msra.mxu0 %v414
    %1703 = vmatprep.subr.mxu0 %v418
    %1704 = vmatpush1.msra.mxu0 %v417
    %1705 = vmatprep.subr.mxu0 %v421
    %1706 = vmatpush1.msra.mxu0 %v420
    %1707 = vmatprep.subr.mxu0 %v424
    %1708 = vmatpush1.msra.mxu0 %v423
    %1709 = vmatprep.subr.mxu0 %v427
    %1710 = vmatpush1.msra.mxu0 %v426
    %1711 = vmatprep.subr.mxu0 %v430
    %1712 = vmatpush1.msra.mxu0 %v429
    %1713 = vmatprep.subr.mxu0 %v433
    %1714 = vmatpush1.msra.mxu0 %v432
    %1715 = vmatprep.subr.mxu0 %v436
    %1716 = vmatpush1.msra.mxu0 %v435
    %1717 = vmatprep.subr.mxu0 0.0
    %1718 = vmatpush1.msra.mxu0 0.0
    %1719 = vmatprep.subr.mxu0 0.0
    %1720 = vmatpush1.msra.mxu0 0.0
    %1721 = vmatprep.subr.mxu0 0.0
    %1722 = vmatpush1.msra.mxu0 0.0
    %1723 = vmatprep.subr.mxu0 0.0
    %1724 = vmatpush1.msra.mxu0 0.0
    %1725 = vmatprep.subr.mxu0 0.0
    %1726 = vmatpush1.msra.mxu0 0.0
    %1727 = vmatprep.subr.mxu0 0.0
    %1728 = vmatpush1.msra.mxu0 0.0
    %1729 = vmatprep.subr.mxu0 0.0
    %1730 = vmatpush1.msra.mxu0 0.0
    %1731 = vmatprep.subr.mxu0 0.0
    %1732 = vmatpush1.msra.mxu0 0.0
    %1733 = vmatprep.subr.mxu0 0.0
    %1734 = vmatpush1.msra.mxu0 0.0
    %1735 = vmatprep.subr.mxu0 0.0
    %1736 = vmatpush1.msra.mxu0 0.0
    %1737 = vmatprep.subr.mxu0 0.0
    %1738 = vmatpush1.msra.mxu0 0.0
    %1739 = vmatprep.subr.mxu0 0.0
    %1740 = vmatpush1.msra.mxu0 0.0
    %1741 = vmatprep.subr.mxu0 0.0
    %1742 = vmatpush1.msra.mxu0 0.0
    %1743 = vmatprep.subr.mxu0 0.0
    %1744 = vmatpush1.msra.mxu0 0.0
    %1745 = vmatprep.subr.mxu0 0.0
    %1746 = vmatpush1.msra.mxu0 0.0
    %1747 = vmatprep.subr.mxu0 0.0
    %1748 = vmatpush1.msra.mxu0 0.0
    %1749 = vmatprep.mubr.f32.mxu0 0.0
    %1750 = vmatmul.mubr.f32.gmra.mrb[0].mxu0 %v1684
    %v1751 = vpop.f32.mrb[0].mxu0
    %v1752 = vadd.f32 %v443, %v1751
    %v1753 = vpop.f32.mrb[0].mxu0
    %v1754 = vadd.f32 %v447, %v1753
    %1755 = vdwg.mxu0
    %1756 = vmatprep.subr.mxu0 0.0
    %1757 = vmatpush1.msra.mxu0 %v392
    %1758 = vmatprep.subr.mxu0 0.0
    %1759 = vmatpush1.msra.mxu0 %v395
    %1760 = vmatprep.subr.mxu0 0.0
    %1761 = vmatpush1.msra.mxu0 %v398
    %1762 = vmatprep.subr.mxu0 0.0
    %1763 = vmatpush1.msra.mxu0 %v401
    %1764 = vmatprep.subr.mxu0 0.0
    %1765 = vmatpush1.msra.mxu0 %v404
    %1766 = vmatprep.subr.mxu0 0.0
    %1767 = vmatpush1.msra.mxu0 %v407
    %1768 = vmatprep.subr.mxu0 0.0
    %1769 = vmatpush1.msra.mxu0 %v410
    %1770 = vmatprep.subr.mxu0 0.0
    %1771 = vmatpush1.msra.mxu0 %v413
    %1772 = vmatprep.subr.mxu0 0.0
    %1773 = vmatpush1.msra.mxu0 %v416
    %1774 = vmatprep.subr.mxu0 0.0
    %1775 = vmatpush1.msra.mxu0 %v419
    %1776 = vmatprep.subr.mxu0 0.0
    %1777 = vmatpush1.msra.mxu0 %v422
    %1778 = vmatprep.subr.mxu0 0.0
    %1779 = vmatpush1.msra.mxu0 %v425
    %1780 = vmatprep.subr.mxu0 0.0
    %1781 = vmatpush1.msra.mxu0 %v428
    %1782 = vmatprep.subr.mxu0 0.0
    %1783 = vmatpush1.msra.mxu0 %v431
    %1784 = vmatprep.subr.mxu0 0.0
    %1785 = vmatpush1.msra.mxu0 %v434
    %1786 = vmatprep.subr.mxu0 0.0
    %1787 = vmatpush1.msra.mxu0 %v437
    %1788 = vmatprep.subr.mxu0 0.0
    %1789 = vmatpush1.msra.mxu0 0.0
    %1790 = vmatprep.subr.mxu0 0.0
    %1791 = vmatpush1.msra.mxu0 0.0
    %1792 = vmatprep.subr.mxu0 0.0
    %1793 = vmatpush1.msra.mxu0 0.0
    %1794 = vmatprep.subr.mxu0 0.0
    %1795 = vmatpush1.msra.mxu0 0.0
    %1796 = vmatprep.subr.mxu0 0.0
    %1797 = vmatpush1.msra.mxu0 0.0
    %1798 = vmatprep.subr.mxu0 0.0
    %1799 = vmatpush1.msra.mxu0 0.0
    %1800 = vmatprep.subr.mxu0 0.0
    %1801 = vmatpush1.msra.mxu0 0.0
    %1802 = vmatprep.subr.mxu0 0.0
    %1803 = vmatpush1.msra.mxu0 0.0
    %1804 = vmatprep.subr.mxu0 0.0
    %1805 = vmatpush1.msra.mxu0 0.0
    %1806 = vmatprep.subr.mxu0 0.0
    %1807 = vmatpush1.msra.mxu0 0.0
    %1808 = vmatprep.subr.mxu0 0.0
    %1809 = vmatpush1.msra.mxu0 0.0
    %1810 = vmatprep.subr.mxu0 0.0
    %1811 = vmatpush1.msra.mxu0 0.0
    %1812 = vmatprep.subr.mxu0 0.0
    %1813 = vmatpush1.msra.mxu0 0.0
    %1814 = vmatprep.subr.mxu0 0.0
    %1815 = vmatpush1.msra.mxu0 0.0
    %1816 = vmatprep.subr.mxu0 0.0
    %1817 = vmatpush1.msra.mxu0 0.0
    %1818 = vmatprep.subr.mxu0 0.0
    %1819 = vmatpush1.msra.mxu0 0.0
    %1820 = vmatprep.mubr.f32.mxu0 0.0
    %1821 = vmatmul.mubr.f32.gmra.mrb[0].mxu0 %v1684
    %v1822 = vpop.f32.mrb[0].mxu0
    %v1823 = vadd.f32 %v451, %v1822
    %v1824 = vpop.f32.mrb[0].mxu0
    %1825 = vdwg.mxu0
    %v1826 = vadd.f32 %v281, %v1752
    %v1827 = vxor.u32 %v1826, 2147483648
    %v1828 = vmul.f32 %v1827, 1.442695
    %v1829 = vpow.pop %v1828
    %v1830 = vadd.f32 %v1829, 1.0
    %v1831 = vrcp.pop %v1830
    %v1832 = vmul.f32 1.0, %v1831
    %v1833 = vadd.f32 %v283, %v1754
    %v1834 = vxor.u32 %v1833, 2147483648
    %v1835 = vmul.f32 %v1834, 1.442695
    %v1836 = vpow.pop %v1835
    %v1837 = vadd.f32 %v1836, 1.0
    %v1838 = vrcp.pop %v1837
    %v1839 = vmul.f32 1.0, %v1838
    %v1840 = vmul.f32 %v1832, %v1823
    %v1841 = vadd.f32 %v387, %v1840
    %v1842 = vtanh.pop %v1841
    %v1843 = vsub.f32 1.0, %v1839
    %v1844 = vmul.f32 %v1843, %v1842
    %v1845 = vmul.f32 %v1839, %v1684
    %v1846 = vadd.f32 %v1844, %v1845
    %1847 = vst [vmem:[#allocation12] sm:$0xff] %v1846
    // Predicated region
    $region54: #{tpu_custom_call.1} parent=1 // pred_check
      _
    $region55: #{tpu_custom_call.1} parent=1 // pred_check_branch
      %1849 = sbr.rel (0) target = $region57
    $region56: #{tpu_custom_call.1} parent=1 // pred_region
      %s1851 = ssub.s32 128, 128
      %1852 = vsyncadd [#allocation4], %s1851
      %s1854 = sshll.u32 [#allocation11], 4
      %s1855 = int_to_ptr.vmem [resolvable:$true] %s1854
      %1857 = dma.vmem_to_hbm [thread:$0]  %s1855, 128, %s8, [#allocation4]
    $region57: #{tpu_custom_call.1} parent=1 // pred_fallthru
      _
    // Predicated region
    $region58: #{tpu_custom_call.1} parent=1 // pred_check
      _
    $region59: #{tpu_custom_call.1} parent=1 // pred_check_branch
      %1859 = sbr.rel (0) target = $region61
    $region60: #{tpu_custom_call.1} parent=1 // pred_region
      %s1861 = ssub.s32 128, 128
      %1862 = vsyncadd [#allocation13], %s1861
      %s1864 = sshll.u32 [#allocation12], 4
      %s1865 = int_to_ptr.vmem [resolvable:$true] %s1864
      %1867 = dma.vmem_to_hbm [thread:$0]  %s1865, 128, %s9, [#allocation13]
    $region61: #{tpu_custom_call.1} parent=1 // pred_fallthru
      _
    // Predicated region
    $region62: #{tpu_custom_call.1} parent=1 // pred_check
      _
    $region63: #{tpu_custom_call.1} parent=1 // pred_check_branch
      %1869 = sbr.rel (0) target = $region65
    $region64: #{tpu_custom_call.1} parent=1 // pred_region
      %1870 = dma.done [#allocation4], 128
    $region65: #{tpu_custom_call.1} parent=1 // pred_fallthru
      _
    // Predicated region
    $region66: #{tpu_custom_call.1} parent=1 // pred_check
      _
    $region67: #{tpu_custom_call.1} parent=1 // pred_check_branch
      %1872 = sbr.rel (0) target = $region69
    $region68: #{tpu_custom_call.1} parent=1 // pred_region
      %1873 = dma.done [#allocation13], 128
    $region69: #{tpu_custom_call.1} parent=1 // pred_fallthru
      _
    %1874 = vsyncpa [#allocation3], 1
    %1875 = vsyncpa [#allocation6], 1
    %1876 = vsyncpa [#allocation9], 1
    %1877 = vsyncpa [#allocation4], 1
    %1878 = vsyncpa [#allocation13], 1

</llo_original>
